<compile_context>
chip_gen: v5e
topology: v5e:2x2
jax: 0.10.0
libtpu: 0.0.40
codegen_flags: <defaults>
</compile_context>

<pallas_src>
import functools

import jax
import jax.numpy as jnp
from jax.experimental import pallas as pl
from jax.experimental.pallas import tpu as pltpu


# ------------------------------ helpers ------------------------------------

def _pick_tile(dim, candidates):
    """Largest candidate that evenly divides `dim`, else the full dim."""
    for c in candidates:
        if c <= dim and dim % c == 0:
            return c
    return dim


def _pick_chunk(L, target):
    for c in (256, 128, 64, 32, 16, 8):
        if c <= target and L % c == 0:
            return c
    return L


def _softplus(x):
    return jnp.maximum(x, 0.0) + jnp.log(1.0 + jnp.exp(-jnp.abs(x)))


# ------------------------- fused RMSNorm + matmul ---------------------------

def _rms_matmul_kernel(x_ref, g_ref, w_ref, o_ref, *, eps):
    x = x_ref[...].astype(jnp.float32)                       # (tm, D)
    var = jnp.mean(x * x, axis=-1, keepdims=True)
    xn = ((x * jax.lax.rsqrt(var + eps)) * g_ref[...]).astype(jnp.bfloat16)
    o_ref[...] = jnp.dot(xn, w_ref[...],
                         preferred_element_type=jnp.float32).astype(o_ref.dtype)


def rms_linear(x2d, gamma, w_t, *, eps):
    M, D = x2d.shape
    N = w_t.shape[1]
    tm = _pick_tile(M, (256, 128, 64, 32, 16, 8))
    tn = _pick_tile(N, (512, 256, 128))
    return pl.pallas_call(
        functools.partial(_rms_matmul_kernel, eps=eps),
        grid=(M // tm, N // tn),
        in_specs=[pl.BlockSpec((tm, D), lambda i, j: (i, 0)),
                  pl.BlockSpec((1, D), lambda i, j: (0, 0)),
                  pl.BlockSpec((D, tn), lambda i, j: (0, j))],
        out_specs=pl.BlockSpec((tm, tn), lambda i, j: (i, j)),
        out_shape=jax.ShapeDtypeStruct((M, N), jnp.bfloat16),
        compiler_params=pltpu.CompilerParams(
            dimension_semantics=("parallel", "parallel")),
        cost_estimate=pl.CostEstimate(
            flops=2 * M * D * N, transcendentals=0,
            bytes_accessed=2 * (M * D + D * N + M * N)),
    )(x2d, gamma.reshape(1, D).astype(jnp.float32), w_t)


# --------------------- tiled matmul with K accumulation ---------------------

def _matmul_kernel(x_ref, w_ref, o_ref, acc_ref):
    @pl.when(pl.program_id(2) == 0)
    def _():
        acc_ref[...] = jnp.zeros_like(acc_ref)

    acc_ref[...] += jnp.dot(x_ref[...].astype(jnp.bfloat16),
                            w_ref[...].astype(jnp.bfloat16),
                            preferred_element_type=jnp.float32)

    @pl.when(pl.program_id(2) == pl.num_programs(2) - 1)
    def _():
        o_ref[...] = acc_ref[...].astype(o_ref.dtype)


def linear(x2d, w_t):
    M, K = x2d.shape
    N = w_t.shape[1]
    tm = _pick_tile(M, (256, 128, 64, 32, 16, 8))
    tn = _pick_tile(N, (512, 256, 128))
    tk = _pick_tile(K, (512, 256))
    return pl.pallas_call(
        _matmul_kernel,
        grid=(M // tm, N // tn, K // tk),
        in_specs=[pl.BlockSpec((tm, tk), lambda i, j, k: (i, k)),
                  pl.BlockSpec((tk, tn), lambda i, j, k: (k, j))],
        out_specs=pl.BlockSpec((tm, tn), lambda i, j, k: (i, j)),
        out_shape=jax.ShapeDtypeStruct((M, N), jnp.bfloat16),
        scratch_shapes=[pltpu.VMEM((tm, tn), jnp.float32)],
        compiler_params=pltpu.CompilerParams(
            dimension_semantics=("parallel", "parallel", "arbitrary")),
        cost_estimate=pl.CostEstimate(
            flops=2 * M * K * N, transcendentals=0,
            bytes_accessed=2 * (M * K + K * N + M * N)),
    )(x2d, w_t)


# ---------------------- fused RMSNorm + SwiGLU MLP --------------------------

def _rms_mlp_kernel(x_ref, g_ref, wg_ref, wu_ref, wd_ref, o_ref, acc_ref, *, eps):
    it = pl.program_id(1)

    @pl.when(it == 0)
    def _():
        acc_ref[...] = jnp.zeros_like(acc_ref)

    x = x_ref[...].astype(jnp.float32)
    var = jnp.mean(x * x, axis=-1, keepdims=True)
    xn = ((x * jax.lax.rsqrt(var + eps)) * g_ref[...]).astype(jnp.bfloat16)

    g = jnp.dot(xn, wg_ref[...], preferred_element_type=jnp.float32)
    u = jnp.dot(xn, wu_ref[...], preferred_element_type=jnp.float32)
    h = (g * jax.nn.sigmoid(g)) * u                           # SwiGLU
    acc_ref[...] += jnp.dot(h.astype(jnp.bfloat16), wd_ref[...],
                            preferred_element_type=jnp.float32)

    @pl.when(it == pl.num_programs(1) - 1)
    def _():
        o_ref[...] = acc_ref[...].astype(o_ref.dtype)


def rms_mlp(x2d, gamma, wg_t, wu_t, wd_t, *, eps):
    M, D = x2d.shape
    I = wg_t.shape[1]
    tm = _pick_tile(M, (256, 128, 64, 32, 16, 8))
    ti = _pick_tile(I, (256, 128))
    return pl.pallas_call(
        functools.partial(_rms_mlp_kernel, eps=eps),
        grid=(M // tm, I // ti),
        in_specs=[pl.BlockSpec((tm, D), lambda i, j: (i, 0)),
                  pl.BlockSpec((1, D), lambda i, j: (0, 0)),
                  pl.BlockSpec((D, ti), lambda i, j: (0, j)),
                  pl.BlockSpec((D, ti), lambda i, j: (0, j)),
                  pl.BlockSpec((ti, D), lambda i, j: (j, 0))],
        out_specs=pl.BlockSpec((tm, D), lambda i, j: (i, 0)),
        out_shape=jax.ShapeDtypeStruct((M, D), jnp.bfloat16),
        scratch_shapes=[pltpu.VMEM((tm, D), jnp.float32)],
        compiler_params=pltpu.CompilerParams(
            dimension_semantics=("parallel", "arbitrary")),
        cost_estimate=pl.CostEstimate(
            flops=6 * M * D * I, transcendentals=M * I,
            bytes_accessed=2 * (M * D * 2 + 3 * D * I)),
    )(x2d, gamma.reshape(1, D).astype(jnp.float32), wg_t, wu_t, wd_t)


# ----------------- depthwise causal conv (chunked, VMEM halo) ---------------

def _conv_kernel(x_ref, w_ref, b_ref, o_ref, xpad_ref):
    ci = pl.program_id(1)
    Tc = x_ref.shape[1]
    C = x_ref.shape[2]
    K = w_ref.shape[0]

    @pl.when(ci == 0)
    def _():
        xpad_ref[0:K - 1, :] = jnp.zeros((K - 1, C), jnp.float32)

    xpad_ref[K - 1:, :] = x_ref[0].astype(jnp.float32)

    acc = jnp.zeros((Tc, C), jnp.float32)
    for k in range(K):                                       # static unroll, K is tiny
        acc = acc + xpad_ref[k:k + Tc, :] * w_ref[k:k + 1, :].astype(jnp.float32)
    acc = acc + b_ref[...].astype(jnp.float32)
    o_ref[0] = acc.astype(o_ref.dtype)

    # carry the last K-1 rows as the next chunk's left halo
    xpad_ref[0:K - 1, :] = xpad_ref[Tc:Tc + K - 1, :]


def conv1d_causal(x, w_kc, b, *, chunk):
    Bsz, L, C = x.shape
    K = w_kc.shape[0]
    Tc = _pick_chunk(L, chunk)
    return pl.pallas_call(
        _conv_kernel,
        grid=(Bsz, L // Tc),
        in_specs=[pl.BlockSpec((1, Tc, C), lambda b_, c: (b_, c, 0)),
                  pl.BlockSpec((K, C), lambda b_, c: (0, 0)),
                  pl.BlockSpec((1, C), lambda b_, c: (0, 0))],
        out_specs=pl.BlockSpec((1, Tc, C), lambda b_, c: (b_, c, 0)),
        out_shape=jax.ShapeDtypeStruct((Bsz, L, C), jnp.bfloat16),
        scratch_shapes=[pltpu.VMEM((Tc + K - 1, C), jnp.float32)],
        compiler_params=pltpu.CompilerParams(
            dimension_semantics=("parallel", "arbitrary")),
    )(x, w_kc, b.reshape(1, C))


# ------------------- chunked DiscreteMamba2 SSM + gating --------------------

def _ssm_gate_kernel(xbc_ref, alog_ref, z_ref, d_ref, zb_ref, o_ref, state_ref,
                     *, H, G, N, P):
    ci = pl.program_id(1)
    T = xbc_ref.shape[1]
    d_inner = H * P
    rep = H // G

    @pl.when(ci == 0)
    def _():
        state_ref[...] = jnp.zeros_like(state_ref)

    xbc = xbc_ref[0].astype(jnp.float32)                     # (T, d_inner + 2*G*N)
    x_all = xbc[:, :d_inner]                                 # (T, d_inner)
    a_log = alog_ref[0].astype(jnp.float32)                  # (T, H)
    log_a = -_softplus(a_log)                                # (T, H), log decay

    row = jax.lax.broadcasted_iota(jnp.int32, (T, T), 0)
    col = jax.lax.broadcasted_iota(jnp.int32, (T, T), 1)
    causal = row >= col
    tril = causal.astype(jnp.float32)

    # Inclusive cumulative log-decay for all heads at once (H-wide MXU matmuls).
    cs_col = jnp.dot(tril, log_a, preferred_element_type=jnp.float32)      # (T, H)
    cs_row = jax.lax.dot_general(log_a, tril, (((0,), (1,)), ((), ())),
                                 preferred_element_type=jnp.float32)       # (H, T)
    exp_cs = jnp.exp(cs_col)                                               # (T, H)

    ys = []
    for h in range(H):                                       # static unroll (few heads)
        g = h // rep
        Bh = xbc[:, d_inner + g * N:d_inner + (g + 1) * N]                 # (T, N)
        Ch = xbc[:, d_inner + G * N + g * N:d_inner + G * N + (g + 1) * N]  # (T, N)
        xh = x_all[:, h * P:(h + 1) * P]                                   # (T, P)

        # intra-chunk (attention-form, only T x T per chunk)
        dlog = cs_col[:, h:h + 1] - cs_row[h:h + 1, :]                     # (T, T)
        decay = jnp.where(causal, jnp.exp(jnp.where(causal, dlog, 0.0)), 0.0)
        scores = jax.lax.dot_general(Ch, Bh, (((1,), (1,)), ((), ())),
                                     preferred_element_type=jnp.float32)   # (T, T)
        y_h = jnp.dot(decay * scores, xh, preferred_element_type=jnp.float32)

        # inter-chunk contribution from carried state
        s_prev = state_ref[h]                                              # (N, P)
        y_h = y_h + exp_cs[:, h:h + 1] * jnp.dot(
            Ch, s_prev, preferred_element_type=jnp.float32)

        # state update for the next chunk
        last = cs_col[T - 1:T, h:h + 1]                                    # (1, 1)
        b_dec = jnp.exp(last - cs_col[:, h:h + 1])                         # (T, 1)
        s_new = jnp.exp(last) * s_prev + jax.lax.dot_general(
            Bh * b_dec, xh, (((0,), (0,)), ((), ())),
            preferred_element_type=jnp.float32)                            # (N, P)
        state_ref[h] = s_new

        ys.append(y_h)

    y_full = jnp.concatenate(ys, axis=1) if H > 1 else ys[0]               # (T, d_inner)
    y_full = y_full + d_ref[...] * x_all                                   # D "skip"
    zg = z_ref[0].astype(jnp.float32) + zb_ref[...]
    o_ref[0] = (y_full * (zg * jax.nn.sigmoid(zg))).astype(o_ref.dtype)    # lane-dense store


def ssm_gate(xbc, a_log, z, d_full, z_bias, *, H, G, N, P, chunk):
    Bsz, L, conv_dim = xbc.shape
    d_inner = H * P
    T = _pick_chunk(L, chunk)
    kern = functools.partial(_ssm_gate_kernel, H=H, G=G, N=N, P=P)
    return pl.pallas_call(
        kern,
        grid=(Bsz, L // T),
        in_specs=[pl.BlockSpec((1, T, conv_dim), lambda b, c: (b, c, 0)),
                  pl.BlockSpec((1, T, H), lambda b, c: (b, c, 0)),
                  pl.BlockSpec((1, T, d_inner), lambda b, c: (b, c, 0)),
                  pl.BlockSpec((1, d_inner), lambda b, c: (0, 0)),
                  pl.BlockSpec((1, d_inner), lambda b, c: (0, 0))],
        out_specs=pl.BlockSpec((1, T, d_inner), lambda b, c: (b, c, 0)),
        out_shape=jax.ShapeDtypeStruct((Bsz, L, d_inner), jnp.bfloat16),
        scratch_shapes=[pltpu.VMEM((H, N, P), jnp.float32)],
        compiler_params=pltpu.CompilerParams(
            dimension_semantics=("parallel", "arbitrary")),
    )(xbc, a_log, z,
      d_full.reshape(1, d_inner).astype(jnp.float32),
      z_bias.reshape(1, d_inner).astype(jnp.float32))


# ------------------------------ RMSNorm (final) -----------------------------

def _rmsnorm_kernel(x_ref, g_ref, o_ref, *, eps):
    x = x_ref[...].astype(jnp.float32)
    var = jnp.mean(x * x, axis=-1, keepdims=True)
    o_ref[...] = ((x * jax.lax.rsqrt(var + eps)) * g_ref[...]).astype(o_ref.dtype)


def rmsnorm(x2d, gamma, eps):
    M, D = x2d.shape
    tm = _pick_tile(M, (512, 256, 128, 64, 32, 16, 8))
    return pl.pallas_call(
        functools.partial(_rmsnorm_kernel, eps=eps),
        grid=(M // tm,),
        in_specs=[pl.BlockSpec((tm, D), lambda i: (i, 0)),
                  pl.BlockSpec((1, D), lambda i: (0, 0))],
        out_specs=pl.BlockSpec((tm, D), lambda i: (i, 0)),
        out_shape=jax.ShapeDtypeStruct((M, D), jnp.float32),
        compiler_params=pltpu.CompilerParams(dimension_semantics=("parallel",)),
    )(x2d, gamma.reshape(1, D).astype(jnp.float32))


# ----------------------------- Model (glue) ---------------------------------

def block_forward(h, p, cfg):
    Bsz, L, D = h.shape
    d_inner = cfg["expand"] * D
    H, G, N = cfg["n_v_heads"], cfg["n_qk_heads"], cfg["d_state"]
    P = d_inner // H
    conv_dim = d_inner + 2 * G * N
    proj_dim = 2 * d_inner + 2 * G * N + H
    chunk = cfg.get("chunk", 128)

    residual = h
    # fused RMSNorm + in_proj (output width zero-padded to a multiple of 128)
    proj = rms_linear(h.reshape(Bsz * L, D), p["ln1_w"], p["in_proj_w"], eps=1e-5)
    proj = proj.reshape(Bsz, L, -1)
    xBC = proj[..., :conv_dim]
    z = proj[..., conv_dim:conv_dim + d_inner]
    A_log = proj[..., conv_dim + d_inner:proj_dim]

    # depthwise causal conv (identity activation), chunked with VMEM halo carry
    xBC = conv1d_causal(xBC, p["conv_w"], p["conv_b"], chunk=chunk)

    # chunked SSM + D-skip + silu(z + z_bias) gating
    d_full = jnp.repeat(p["D"], P)                           # per-channel D skip
    y = ssm_gate(xBC, A_log, z, d_full, p["z_bias"],
                 H=H, G=G, N=N, P=P, chunk=chunk)            # (B, L, d_inner) bf16

    mixer_out = linear(y.reshape(Bsz * L, d_inner), p["out_proj_w"]).reshape(Bsz, L, D)
    h = (residual + mixer_out).astype(jnp.bfloat16)

    residual = h
    mlp_out = rms_mlp(h.reshape(Bsz * L, D), p["ln2_w"],
                      p["gate_w"], p["up_w"], p["down_w"], eps=1e-5)
    h = (residual + mlp_out.reshape(Bsz, L, D)).astype(jnp.bfloat16)
    return h


def mixer_model_forward(input_ids, params, cfg):
    # TODO(synk): inference cache / return_hidden_states paths not implemented.
    h = jnp.take(params["embedding"], input_ids, axis=0).astype(jnp.bfloat16)
    Bsz, L, D = h.shape
    for lp in params["layers"]:
        h = block_forward(h, lp, cfg)
    last = rmsnorm(h.reshape(Bsz * L, D), params["final_ln_w"],
                   cfg["norm_eps"]).reshape(Bsz, L, D)
    return {"last_hidden_state": last, "all_hidden_states": ()}


def init_params(key, cfg):
    D = cfg["d_model"]
    d_inner = cfg["expand"] * D
    H, G, N, K = cfg["n_v_heads"], cfg["n_qk_heads"], cfg["d_state"], cfg["d_conv"]
    conv_dim = d_inner + 2 * G * N
    proj_dim = 2 * d_inner + 2 * G * N + H
    proj_pad = ((proj_dim + 127) // 128) * 128
    I = cfg["d_intermediate"]

    def normal(k, shape, scale=0.02):
        return scale * jax.random.normal(k, shape, dtype=jnp.float32)

    keys = jax.random.split(key, 1 + cfg["n_layer"])
    params = {"embedding": normal(keys[0], (cfg["vocab_size"], D), 1.0).astype(jnp.bfloat16),
              "final_ln_w": jnp.ones((D,), jnp.float32),
              "layers": []}
    for li in range(cfg["n_layer"]):
        ks = jax.random.split(keys[1 + li], 8)
        w_in = jnp.zeros((D, proj_pad), jnp.float32)
        w_in = w_in.at[:, :proj_dim].set(normal(ks[0], (D, proj_dim)))
        params["layers"].append({
            "ln1_w": jnp.ones((D,), jnp.float32),
            "in_proj_w": w_in.astype(jnp.bfloat16),
            "conv_w": normal(ks[1], (K, conv_dim), 0.1),
            "conv_b": normal(ks[2], (conv_dim,), 0.1),
            "z_bias": jnp.zeros((d_inner,), jnp.float32),
            "D": jnp.ones((H,), jnp.float32),
            "out_proj_w": normal(ks[3], (d_inner, D)).astype(jnp.bfloat16),
            "ln2_w": jnp.ones((D,), jnp.float32),
            "gate_w": normal(ks[4], (D, I)).astype(jnp.bfloat16),
            "up_w": normal(ks[5], (D, I)).astype(jnp.bfloat16),
            "down_w": normal(ks[6], (I, D)).astype(jnp.bfloat16),
        })
    return params


if __name__ == "__main__":
    cfg = dict(vocab_size=64, d_model=32, n_layer=2, norm_eps=1e-5,
               d_state=8, n_qk_heads=2, n_v_heads=2, d_conv=4, expand=1,
               d_intermediate=64, chunk=8)   # chunk=8 so L=16 exercises state carry

    key = jax.random.PRNGKey(0)
    k_param, k_ids = jax.random.split(key)
    params = init_params(k_param, cfg)
    input_ids = jax.random.randint(k_ids, (2, 16), 0, cfg["vocab_size"])  # (batch=2, seq=16)

    fwd = jax.jit(functools.partial(mixer_model_forward, cfg=cfg))
    out = fwd(input_ids, params)
    last = jax.block_until_ready(out["last_hidden_state"])
    assert last.shape == (2, 16, cfg["d_model"])
    assert bool(jnp.all(jnp.isfinite(last)))
    print("KERNEL_OK")
</pallas_src>

<mosaic_0001>
module attributes {stable_mosaic.version = 11 : i64} {
  func.func @_rms_matmul_kernel(%arg0: i32, %arg1: i32, %arg2: memref<32x32xbf16, #tpu.memory_space<vmem>>, %arg3: memref<1x32xf32, #tpu.memory_space<vmem>>, %arg4: memref<32x128xbf16, #tpu.memory_space<vmem>>, %arg5: memref<32x128xbf16, #tpu.memory_space<vmem>>) attributes {dimension_semantics = [#tpu.dimension_semantics<parallel>, #tpu.dimension_semantics<parallel>], iteration_bounds = array<i64: 1, 1>, scalar_prefetch = 0 : i64, scratch_operands = 0 : i64, tpu.core_type = #tpu.core_type<tc>, window_params = [{transform_indices = @transform_0, window_bounds = array<i64: 32, 32>}, {pipeline_mode = #tpu.pipeline_mode<synchronous>, transform_indices = @transform_1, window_bounds = array<i64: 1, 32>}, {transform_indices = @transform_2, window_bounds = array<i64: 32, 128>}, {transform_indices = @transform_3, window_bounds = array<i64: 32, 128>}]} {
    %c0 = arith.constant 0 : index
    %c0_0 = arith.constant 0 : index
    %0 = vector.load %arg2[%c0, %c0_0] : memref<32x32xbf16, #tpu.memory_space<vmem>>, vector<32x32xbf16>
    %1 = arith.extf %0 : vector<32x32xbf16> to vector<32x32xf32>
    %2 = arith.mulf %1, %1 : vector<32x32xf32>
    %cst = arith.constant dense<0.000000e+00> : vector<32xf32>
    %3 = vector.multi_reduction <add>, %2, %cst [1] : vector<32x32xf32> to vector<32xf32>
    %4 = vector.shape_cast %3 : vector<32xf32> to vector<32x1xf32>
    %cst_1 = arith.constant 3.200000e+01 : f32
    %5 = vector.broadcast %cst_1 : f32 to vector<32x1xf32>
    %6 = arith.divf %4, %5 : vector<32x1xf32>
    %cst_2 = arith.constant 9.99999974E-6 : f32
    %7 = vector.broadcast %cst_2 : f32 to vector<32x1xf32>
    %8 = arith.addf %6, %7 : vector<32x1xf32>
    %9 = math.rsqrt %8 : vector<32x1xf32>
    %10 = vector.broadcast %9 : vector<32x1xf32> to vector<32x32xf32>
    %11 = arith.mulf %1, %10 : vector<32x32xf32>
    %c0_3 = arith.constant 0 : index
    %c0_4 = arith.constant 0 : index
    %12 = vector.load %arg3[%c0_3, %c0_4] : memref<1x32xf32, #tpu.memory_space<vmem>>, vector<1x32xf32>
    %13 = vector.broadcast %12 : vector<1x32xf32> to vector<32x32xf32>
    %14 = arith.mulf %11, %13 : vector<32x32xf32>
    %15 = arith.truncf %14 : vector<32x32xf32> to vector<32x32xbf16>
    %c0_5 = arith.constant 0 : index
    %c0_6 = arith.constant 0 : index
    %16 = vector.load %arg4[%c0_5, %c0_6] : memref<32x128xbf16, #tpu.memory_space<vmem>>, vector<32x128xbf16>
    %cst_7 = arith.constant dense<0.000000e+00> : vector<32x128xf32>
    %17 = tpu.matmul %15, %16, %cst_7 {dimension_numbers = #tpu.dot_dimension_numbers<[1], [0], [0], [1], [0, 0, 1, 1], [], []>} : vector<32x32xbf16>, vector<32x128xbf16>, vector<32x128xf32> -> vector<32x128xf32>
    %18 = arith.truncf %17 : vector<32x128xf32> to vector<32x128xbf16>
    %c0_8 = arith.constant 0 : index
    %c0_9 = arith.constant 0 : index
    %19 = vector.load %arg5[%c0_8, %c0_9] : memref<32x128xbf16, #tpu.memory_space<vmem>>, vector<32x128xbf16>
    tpu.vector_store %arg5[%c0_8, %c0_9], %18 {strides = array<i32>} : memref<32x128xbf16, #tpu.memory_space<vmem>>, vector<32x128xbf16>,
    return
  }
  func.func @transform_0(%arg0: i32, %arg1: i32) -> (i32, i32) {
    %c0_i32 = arith.constant 0 : i32
    %c0_i32_0 = arith.constant 0 : i32
    return %arg0, %c0_i32 : i32, i32
  }
  func.func @transform_1(%arg0: i32, %arg1: i32) -> (i32, i32) {
    %c0_i32 = arith.constant 0 : i32
    %c0_i32_0 = arith.constant 0 : i32
    %c0_i32_1 = arith.constant 0 : i32
    return %c0_i32, %c0_i32_0 : i32, i32
  }
  func.func @transform_2(%arg0: i32, %arg1: i32) -> (i32, i32) {
    %c0_i32 = arith.constant 0 : i32
    %c0_i32_0 = arith.constant 0 : i32
    return %c0_i32, %arg1 : i32, i32
  }
  func.func @transform_3(%arg0: i32, %arg1: i32) -> (i32, i32) {
    %c0_i32 = arith.constant 0 : i32
    return %arg0, %arg1 : i32, i32
  }
}

module attributes {stable_mosaic.version = 11 : i64} {
  func.func @_conv_kernel(%arg0: i32, %arg1: i32, %arg2: memref<1x8x64xbf16, #tpu.memory_space<vmem>>, %arg3: memref<4x64xf32, #tpu.memory_space<vmem>>, %arg4: memref<1x64xf32, #tpu.memory_space<vmem>>, %arg5: memref<1x8x64xbf16, #tpu.memory_space<vmem>>, %arg6: memref<11x64xf32, #tpu.memory_space<vmem>>) attributes {dimension_semantics = [#tpu.dimension_semantics<parallel>, #tpu.dimension_semantics<arbitrary>], iteration_bounds = array<i64: 2, 2>, scalar_prefetch = 0 : i64, scratch_operands = 1 : i64, tpu.core_type = #tpu.core_type<tc>, window_params = [{transform_indices = @transform_0, window_bounds = array<i64: 1, 8, 64>}, {pipeline_mode = #tpu.pipeline_mode<synchronous>, transform_indices = @transform_1, window_bounds = array<i64: 4, 64>}, {pipeline_mode = #tpu.pipeline_mode<synchronous>, transform_indices = @transform_2, window_bounds = array<i64: 1, 64>}, {transform_indices = @transform_3, window_bounds = array<i64: 1, 8, 64>}]} {
    %c0_i32 = arith.constant 0 : i32
    %0 = arith.cmpi eq, %arg1, %c0_i32 : i32
    %1 = arith.extui %0 : i1 to i32
    %c0_i32_0 = arith.constant 0 : i32
    %2 = arith.cmpi ne, %1, %c0_i32_0 : i32
    scf.if %2 {
      %cst_26 = arith.constant 0.000000e+00 : f32
      %37 = vector.broadcast %cst_26 : f32 to vector<3x64xf32>
      %c0_27 = arith.constant 0 : index
      %c0_28 = arith.constant 0 : index
      %38 = vector.load %arg6[%c0_27, %c0_28] : memref<11x64xf32, #tpu.memory_space<vmem>>, vector<3x64xf32>
      tpu.vector_store %arg6[%c0_27, %c0_28], %37 {strides = array<i32>} : memref<11x64xf32, #tpu.memory_space<vmem>>, vector<3x64xf32>,
    } else {
    }
    %c0 = arith.constant 0 : index
    %c0_1 = arith.constant 0 : index
    %c0_2 = arith.constant 0 : index
    %3 = vector.load %arg2[%c0, %c0_1, %c0_2] : memref<1x8x64xbf16, #tpu.memory_space<vmem>>, vector<1x8x64xbf16>
    %4 = vector.shape_cast %3 : vector<1x8x64xbf16> to vector<8x64xbf16>
    %5 = arith.extf %4 : vector<8x64xbf16> to vector<8x64xf32>
    %c3 = arith.constant 3 : index
    %c0_3 = arith.constant 0 : index
    %6 = vector.load %arg6[%c3, %c0_3] : memref<11x64xf32, #tpu.memory_space<vmem>>, vector<8x64xf32>
    tpu.vector_store %arg6[%c3, %c0_3], %5 {strides = array<i32>} : memref<11x64xf32, #tpu.memory_space<vmem>>, vector<8x64xf32>,
    %cst = arith.constant 0.000000e+00 : f32
    %7 = vector.broadcast %cst : f32 to vector<8x64xf32>
    %c0_4 = arith.constant 0 : index
    %c0_5 = arith.constant 0 : index
    %8 = vector.load %arg6[%c0_4, %c0_5] : memref<11x64xf32, #tpu.memory_space<vmem>>, vector<8x64xf32>
    %c0_6 = arith.constant 0 : index
    %c0_7 = arith.constant 0 : index
    %9 = vector.load %arg3[%c0_6, %c0_7] : memref<4x64xf32, #tpu.memory_space<vmem>>, vector<1x64xf32>
    %10 = vector.broadcast %9 : vector<1x64xf32> to vector<8x64xf32>
    %11 = arith.mulf %8, %10 : vector<8x64xf32>
    %12 = arith.addf %7, %11 : vector<8x64xf32>
    %c1 = arith.constant 1 : index
    %c0_8 = arith.constant 0 : index
    %13 = vector.load %arg6[%c1, %c0_8] : memref<11x64xf32, #tpu.memory_space<vmem>>, vector<8x64xf32>
    %c1_9 = arith.constant 1 : index
    %c0_10 = arith.constant 0 : index
    %14 = vector.load %arg3[%c1_9, %c0_10] : memref<4x64xf32, #tpu.memory_space<vmem>>, vector<1x64xf32>
    %15 = vector.broadcast %14 : vector<1x64xf32> to vector<8x64xf32>
    %16 = arith.mulf %13, %15 : vector<8x64xf32>
    %17 = arith.addf %12, %16 : vector<8x64xf32>
    %c2 = arith.constant 2 : index
    %c0_11 = arith.constant 0 : index
    %18 = vector.load %arg6[%c2, %c0_11] : memref<11x64xf32, #tpu.memory_space<vmem>>, vector<8x64xf32>
    %c2_12 = arith.constant 2 : index
    %c0_13 = arith.constant 0 : index
    %19 = vector.load %arg3[%c2_12, %c0_13] : memref<4x64xf32, #tpu.memory_space<vmem>>, vector<1x64xf32>
    %20 = vector.broadcast %19 : vector<1x64xf32> to vector<8x64xf32>
    %21 = arith.mulf %18, %20 : vector<8x64xf32>
    %22 = arith.addf %17, %21 : vector<8x64xf32>
    %c3_14 = arith.constant 3 : index
    %c0_15 = arith.constant 0 : index
    %23 = vector.load %arg6[%c3_14, %c0_15] : memref<11x64xf32, #tpu.memory_space<vmem>>, vector<8x64xf32>
    %c3_16 = arith.constant 3 : index
    %c0_17 = arith.constant 0 : index
    %24 = vector.load %arg3[%c3_16, %c0_17] : memref<4x64xf32, #tpu.memory_space<vmem>>, vector<1x64xf32>
    %25 = vector.broadcast %24 : vector<1x64xf32> to vector<8x64xf32>
    %26 = arith.mulf %23, %25 : vector<8x64xf32>
    %27 = arith.addf %22, %26 : vector<8x64xf32>
    %c0_18 = arith.constant 0 : index
    %c0_19 = arith.constant 0 : index
    %28 = vector.load %arg4[%c0_18, %c0_19] : memref<1x64xf32, #tpu.memory_space<vmem>>, vector<1x64xf32>
    %29 = vector.broadcast %28 : vector<1x64xf32> to vector<8x64xf32>
    %30 = arith.addf %27, %29 : vector<8x64xf32>
    %31 = arith.truncf %30 : vector<8x64xf32> to vector<8x64xbf16>
    %c0_20 = arith.constant 0 : index
    %c0_21 = arith.constant 0 : index
    %c0_22 = arith.constant 0 : index
    %32 = vector.load %arg5[%c0_20, %c0_21, %c0_22] : memref<1x8x64xbf16, #tpu.memory_space<vmem>>, vector<1x8x64xbf16>
    %33 = vector.shape_cast %32 : vector<1x8x64xbf16> to vector<8x64xbf16>
    %34 = vector.shape_cast %31 : vector<8x64xbf16> to vector<1x8x64xbf16>
    tpu.vector_store %arg5[%c0_20, %c0_21, %c0_22], %34 {strides = array<i32>} : memref<1x8x64xbf16, #tpu.memory_space<vmem>>, vector<1x8x64xbf16>,
    %c8 = arith.constant 8 : index
    %c0_23 = arith.constant 0 : index
    %35 = vector.load %arg6[%c8, %c0_23] : memref<11x64xf32, #tpu.memory_space<vmem>>, vector<3x64xf32>
    %c0_24 = arith.constant 0 : index
    %c0_25 = arith.constant 0 : index
    %36 = vector.load %arg6[%c0_24, %c0_25] : memref<11x64xf32, #tpu.memory_space<vmem>>, vector<3x64xf32>
    tpu.vector_store %arg6[%c0_24, %c0_25], %35 {strides = array<i32>} : memref<11x64xf32, #tpu.memory_space<vmem>>, vector<3x64xf32>,
    return
  }
  func.func @transform_0(%arg0: i32, %arg1: i32) -> (i32, i32, i32) {
    %c0_i32 = arith.constant 0 : i32
    %c0_i32_0 = arith.constant 0 : i32
    return %arg0, %arg1, %c0_i32 : i32, i32, i32
  }
  func.func @transform_1(%arg0: i32, %arg1: i32) -> (i32, i32) {
    %c0_i32 = arith.constant 0 : i32
    %c0_i32_0 = arith.constant 0 : i32
    %c0_i32_1 = arith.constant 0 : i32
    return %c0_i32, %c0_i32_0 : i32, i32
  }
  func.func @transform_2(%arg0: i32, %arg1: i32) -> (i32, i32) {
    %c0_i32 = arith.constant 0 : i32
    %c0_i32_0 = arith.constant 0 : i32
    %c0_i32_1 = arith.constant 0 : i32
    return %c0_i32, %c0_i32_0 : i32, i32
  }
  func.func @transform_3(%arg0: i32, %arg1: i32) -> (i32, i32, i32) {
    %c0_i32 = arith.constant 0 : i32
    %c0_i32_0 = arith.constant 0 : i32
    return %arg0, %arg1, %c0_i32 : i32, i32, i32
  }
}

module attributes {stable_mosaic.version = 11 : i64} {
  func.func @_ssm_gate_kernel(%arg0: i32, %arg1: i32, %arg2: memref<1x8x64xbf16, #tpu.memory_space<vmem>>, %arg3: memref<1x8x2xbf16, #tpu.memory_space<vmem>>, %arg4: memref<1x8x32xbf16, #tpu.memory_space<vmem>>, %arg5: memref<1x32xf32, #tpu.memory_space<vmem>>, %arg6: memref<1x32xf32, #tpu.memory_space<vmem>>, %arg7: memref<1x8x32xbf16, #tpu.memory_space<vmem>>, %arg8: memref<2x8x16xf32, #tpu.memory_space<vmem>>) attributes {dimension_semantics = [#tpu.dimension_semantics<parallel>, #tpu.dimension_semantics<arbitrary>], iteration_bounds = array<i64: 2, 2>, scalar_prefetch = 0 : i64, scratch_operands = 1 : i64, tpu.core_type = #tpu.core_type<tc>, window_params = [{transform_indices = @transform_0, window_bounds = array<i64: 1, 8, 64>}, {transform_indices = @transform_1, window_bounds = array<i64: 1, 8, 2>}, {transform_indices = @transform_2, window_bounds = array<i64: 1, 8, 32>}, {pipeline_mode = #tpu.pipeline_mode<synchronous>, transform_indices = @transform_3, window_bounds = array<i64: 1, 32>}, {pipeline_mode = #tpu.pipeline_mode<synchronous>, transform_indices = @transform_4, window_bounds = array<i64: 1, 32>}, {transform_indices = @transform_5, window_bounds = array<i64: 1, 8, 32>}]} {
    %c0_i32 = arith.constant 0 : i32
    %0 = arith.cmpi eq, %arg1, %c0_i32 : i32
    %1 = arith.extui %0 : i1 to i32
    %c0_i32_0 = arith.constant 0 : i32
    %2 = arith.cmpi ne, %1, %c0_i32_0 : i32
    scf.if %2 {
      %cst_45 = arith.constant 0.000000e+00 : f32
      %128 = vector.broadcast %cst_45 : f32 to vector<2x8x16xf32>
      %c0_46 = arith.constant 0 : index
      %c0_47 = arith.constant 0 : index
      %c0_48 = arith.constant 0 : index
      %129 = vector.load %arg8[%c0_46, %c0_47, %c0_48] : memref<2x8x16xf32, #tpu.memory_space<vmem>>, vector<2x8x16xf32>
      tpu.vector_store %arg8[%c0_46, %c0_47, %c0_48], %128 {strides = array<i32>} : memref<2x8x16xf32, #tpu.memory_space<vmem>>, vector<2x8x16xf32>,
    } else {
    }
    %c0 = arith.constant 0 : index
    %c0_1 = arith.constant 0 : index
    %c0_2 = arith.constant 0 : index
    %3 = vector.load %arg2[%c0, %c0_1, %c0_2] : memref<1x8x64xbf16, #tpu.memory_space<vmem>>, vector<1x8x64xbf16>
    %4 = vector.shape_cast %3 : vector<1x8x64xbf16> to vector<8x64xbf16>
    %5 = arith.extf %4 : vector<8x64xbf16> to vector<8x64xf32>
    %6 = vector.extract_strided_slice %5 {offsets = [0, 0], sizes = [8, 32], strides = [1, 1]} : vector<8x64xf32> to vector<8x32xf32>
    %c0_3 = arith.constant 0 : index
    %c0_4 = arith.constant 0 : index
    %c0_5 = arith.constant 0 : index
    %7 = vector.load %arg3[%c0_3, %c0_4, %c0_5] : memref<1x8x2xbf16, #tpu.memory_space<vmem>>, vector<1x8x2xbf16>
    %8 = vector.shape_cast %7 : vector<1x8x2xbf16> to vector<8x2xbf16>
    %9 = arith.extf %8 : vector<8x2xbf16> to vector<8x2xf32>
    %cst = arith.constant 0.000000e+00 : f32
    %10 = vector.broadcast %cst : f32 to vector<8x2xf32>
    %11 = arith.maximumf %9, %10 : vector<8x2xf32>
    %12 = math.absf %9 : vector<8x2xf32>
    %cst_6 = arith.constant 0.000000e+00 : f32
    %13 = vector.broadcast %cst_6 : f32 to vector<8x2xf32>
    %14 = arith.subf %13, %12 : vector<8x2xf32>
    %15 = math.exp %14 : vector<8x2xf32>
    %cst_7 = arith.constant 1.000000e+00 : f32
    %16 = vector.broadcast %cst_7 : f32 to vector<8x2xf32>
    %17 = arith.addf %16, %15 : vector<8x2xf32>
    %18 = math.log %17 : vector<8x2xf32>
    %19 = arith.addf %11, %18 : vector<8x2xf32>
    %cst_8 = arith.constant 0.000000e+00 : f32
    %20 = vector.broadcast %cst_8 : f32 to vector<8x2xf32>
    %21 = arith.subf %20, %19 : vector<8x2xf32>
    %22 = tpu.iota {dimensions = array<i32: 0>} : vector<8x8xi32>
    %23 = tpu.iota {dimensions = array<i32: 1>} : vector<8x8xi32>
    %24 = arith.cmpi sge, %22, %23 : vector<8x8xi32>
    %25 = arith.extui %24 : vector<8x8xi1> to vector<8x8xi32>
    %26 = arith.sitofp %25 : vector<8x8xi32> to vector<8x8xf32>
    %cst_9 = arith.constant dense<0.000000e+00> : vector<8x2xf32>
    %27 = tpu.matmul %26, %21, %cst_9 {dimension_numbers = #tpu.dot_dimension_numbers<[1], [0], [0], [1], [0, 0, 1, 1], [], []>} : vector<8x8xf32>, vector<8x2xf32>, vector<8x2xf32> -> vector<8x2xf32>
    %cst_10 = arith.constant dense<0.000000e+00> : vector<2x8xf32>
    %28 = tpu.matmul %21, %26, %cst_10 {dimension_numbers = #tpu.dot_dimension_numbers<[0], [1], [1], [0], [0, 1, 1, 0], [], []>} : vector<8x2xf32>, vector<8x8xf32>, vector<2x8xf32> -> vector<2x8xf32>
    %29 = math.exp %27 : vector<8x2xf32>
    %30 = vector.extract_strided_slice %5 {offsets = [0, 32], sizes = [8, 8], strides = [1, 1]} : vector<8x64xf32> to vector<8x8xf32>
    %31 = vector.extract_strided_slice %5 {offsets = [0, 48], sizes = [8, 8], strides = [1, 1]} : vector<8x64xf32> to vector<8x8xf32>
    %32 = vector.extract_strided_slice %6 {offsets = [0, 0], sizes = [8, 16], strides = [1, 1]} : vector<8x32xf32> to vector<8x16xf32>
    %33 = vector.extract_strided_slice %27 {offsets = [0, 0], sizes = [8, 1], strides = [1, 1]} : vector<8x2xf32> to vector<8x1xf32>
    %34 = vector.extract_strided_slice %28 {offsets = [0, 0], sizes = [1, 8], strides = [1, 1]} : vector<2x8xf32> to vector<1x8xf32>
    %35 = vector.broadcast %33 : vector<8x1xf32> to vector<8x8xf32>
    %36 = vector.broadcast %34 : vector<1x8xf32> to vector<8x8xf32>
    %37 = arith.subf %35, %36 : vector<8x8xf32>
    %cst_11 = arith.constant 0.000000e+00 : f32
    %38 = vector.broadcast %cst_11 : f32 to vector<8x8xf32>
    %39 = arith.select %24, %37, %38 : vector<8x8xi1>, vector<8x8xf32>
    %40 = math.exp %39 : vector<8x8xf32>
    %cst_12 = arith.constant 0.000000e+00 : f32
    %41 = vector.broadcast %cst_12 : f32 to vector<8x8xf32>
    %42 = arith.select %24, %40, %41 : vector<8x8xi1>, vector<8x8xf32>
    %cst_13 = arith.constant dense<0.000000e+00> : vector<8x8xf32>
    %43 = tpu.matmul %31, %30, %cst_13 {dimension_numbers = #tpu.dot_dimension_numbers<[1], [1], [0], [0], [0, 0, 1, 0], [], []>} : vector<8x8xf32>, vector<8x8xf32>, vector<8x8xf32> -> vector<8x8xf32>
    %44 = arith.mulf %42, %43 : vector<8x8xf32>
    %cst_14 = arith.constant dense<0.000000e+00> : vector<8x16xf32>
    %45 = tpu.matmul %44, %32, %cst_14 {dimension_numbers = #tpu.dot_dimension_numbers<[1], [0], [0], [1], [0, 0, 1, 1], [], []>} : vector<8x8xf32>, vector<8x16xf32>, vector<8x16xf32> -> vector<8x16xf32>
    %c0_15 = arith.constant 0 : index
    %c0_16 = arith.constant 0 : index
    %c0_17 = arith.constant 0 : index
    %46 = vector.load %arg8[%c0_15, %c0_16, %c0_17] : memref<2x8x16xf32, #tpu.memory_space<vmem>>, vector<1x8x16xf32>
    %47 = vector.shape_cast %46 : vector<1x8x16xf32> to vector<8x16xf32>
    %48 = vector.extract_strided_slice %29 {offsets = [0, 0], sizes = [8, 1], strides = [1, 1]} : vector<8x2xf32> to vector<8x1xf32>
    %cst_18 = arith.constant dense<0.000000e+00> : vector<8x16xf32>
    %49 = tpu.matmul %31, %47, %cst_18 {dimension_numbers = #tpu.dot_dimension_numbers<[1], [0], [0], [1], [0, 0, 1, 1], [], []>} : vector<8x8xf32>, vector<8x16xf32>, vector<8x16xf32> -> vector<8x16xf32>
    %50 = vector.broadcast %48 : vector<8x1xf32> to vector<8x16xf32>
    %51 = arith.mulf %50, %49 : vector<8x16xf32>
    %52 = arith.addf %45, %51 : vector<8x16xf32>
    %53 = vector.extract_strided_slice %27 {offsets = [7, 0], sizes = [1, 1], strides = [1, 1]} : vector<8x2xf32> to vector<1x1xf32>
    %54 = vector.extract_strided_slice %27 {offsets = [0, 0], sizes = [8, 1], strides = [1, 1]} : vector<8x2xf32> to vector<8x1xf32>
    %55 = vector.broadcast %53 : vector<1x1xf32> to vector<8x1xf32>
    %56 = arith.subf %55, %54 : vector<8x1xf32>
    %57 = math.exp %56 : vector<8x1xf32>
    %58 = math.exp %53 : vector<1x1xf32>
    %59 = vector.broadcast %58 : vector<1x1xf32> to vector<8x16xf32>
    %60 = arith.mulf %59, %47 : vector<8x16xf32>
    %61 = vector.broadcast %57 : vector<8x1xf32> to vector<8x8xf32>
    %62 = arith.mulf %30, %61 : vector<8x8xf32>
    %cst_19 = arith.constant dense<0.000000e+00> : vector<8x16xf32>
    %63 = tpu.matmul %62, %32, %cst_19 {dimension_numbers = #tpu.dot_dimension_numbers<[0], [0], [1], [1], [0, 1, 1, 1], [], []>} : vector<8x8xf32>, vector<8x16xf32>, vector<8x16xf32> -> vector<8x16xf32>
    %64 = arith.addf %60, %63 : vector<8x16xf32>
    %c0_20 = arith.constant 0 : index
    %c0_21 = arith.constant 0 : index
    %c0_22 = arith.constant 0 : index
    %65 = vector.load %arg8[%c0_20, %c0_21, %c0_22] : memref<2x8x16xf32, #tpu.memory_space<vmem>>, vector<1x8x16xf32>
    %66 = vector.shape_cast %65 : vector<1x8x16xf32> to vector<8x16xf32>
    %67 = vector.shape_cast %64 : vector<8x16xf32> to vector<1x8x16xf32>
    tpu.vector_store %arg8[%c0_20, %c0_21, %c0_22], %67 {strides = array<i32>} : memref<2x8x16xf32, #tpu.memory_space<vmem>>, vector<1x8x16xf32>,
    %68 = vector.extract_strided_slice %5 {offsets = [0, 40], sizes = [8, 8], strides = [1, 1]} : vector<8x64xf32> to vector<8x8xf32>
    %69 = vector.extract_strided_slice %5 {offsets = [0, 56], sizes = [8, 8], strides = [1, 1]} : vector<8x64xf32> to vector<8x8xf32>
    %70 = vector.extract_strided_slice %6 {offsets = [0, 16], sizes = [8, 16], strides = [1, 1]} : vector<8x32xf32> to vector<8x16xf32>
    %71 = vector.extract_strided_slice %27 {offsets = [0, 1], sizes = [8, 1], strides = [1, 1]} : vector<8x2xf32> to vector<8x1xf32>
    %72 = vector.extract_strided_slice %28 {offsets = [1, 0], sizes = [1, 8], strides = [1, 1]} : vector<2x8xf32> to vector<1x8xf32>
    %73 = vector.broadcast %71 : vector<8x1xf32> to vector<8x8xf32>
    %74 = vector.broadcast %72 : vector<1x8xf32> to vector<8x8xf32>
    %75 = arith.subf %73, %74 : vector<8x8xf32>
    %cst_23 = arith.constant 0.000000e+00 : f32
    %76 = vector.broadcast %cst_23 : f32 to vector<8x8xf32>
    %77 = arith.select %24, %75, %76 : vector<8x8xi1>, vector<8x8xf32>
    %78 = math.exp %77 : vector<8x8xf32>
    %cst_24 = arith.constant 0.000000e+00 : f32
    %79 = vector.broadcast %cst_24 : f32 to vector<8x8xf32>
    %80 = arith.select %24, %78, %79 : vector<8x8xi1>, vector<8x8xf32>
    %cst_25 = arith.constant dense<0.000000e+00> : vector<8x8xf32>
    %81 = tpu.matmul %69, %68, %cst_25 {dimension_numbers = #tpu.dot_dimension_numbers<[1], [1], [0], [0], [0, 0, 1, 0], [], []>} : vector<8x8xf32>, vector<8x8xf32>, vector<8x8xf32> -> vector<8x8xf32>
    %82 = arith.mulf %80, %81 : vector<8x8xf32>
    %cst_26 = arith.constant dense<0.000000e+00> : vector<8x16xf32>
    %83 = tpu.matmul %82, %70, %cst_26 {dimension_numbers = #tpu.dot_dimension_numbers<[1], [0], [0], [1], [0, 0, 1, 1], [], []>} : vector<8x8xf32>, vector<8x16xf32>, vector<8x16xf32> -> vector<8x16xf32>
    %c1 = arith.constant 1 : index
    %c0_27 = arith.constant 0 : index
    %c0_28 = arith.constant 0 : index
    %84 = vector.load %arg8[%c1, %c0_27, %c0_28] : memref<2x8x16xf32, #tpu.memory_space<vmem>>, vector<1x8x16xf32>
    %85 = vector.shape_cast %84 : vector<1x8x16xf32> to vector<8x16xf32>
    %86 = vector.extract_strided_slice %29 {offsets = [0, 1], sizes = [8, 1], strides = [1, 1]} : vector<8x2xf32> to vector<8x1xf32>
    %cst_29 = arith.constant dense<0.000000e+00> : vector<8x16xf32>
    %87 = tpu.matmul %69, %85, %cst_29 {dimension_numbers = #tpu.dot_dimension_numbers<[1], [0], [0], [1], [0, 0, 1, 1], [], []>} : vector<8x8xf32>, vector<8x16xf32>, vector<8x16xf32> -> vector<8x16xf32>
    %88 = vector.broadcast %86 : vector<8x1xf32> to vector<8x16xf32>
    %89 = arith.mulf %88, %87 : vector<8x16xf32>
    %90 = arith.addf %83, %89 : vector<8x16xf32>
    %91 = vector.extract_strided_slice %27 {offsets = [7, 1], sizes = [1, 1], strides = [1, 1]} : vector<8x2xf32> to vector<1x1xf32>
    %92 = vector.extract_strided_slice %27 {offsets = [0, 1], sizes = [8, 1], strides = [1, 1]} : vector<8x2xf32> to vector<8x1xf32>
    %93 = vector.broadcast %91 : vector<1x1xf32> to vector<8x1xf32>
    %94 = arith.subf %93, %92 : vector<8x1xf32>
    %95 = math.exp %94 : vector<8x1xf32>
    %96 = math.exp %91 : vector<1x1xf32>
    %97 = vector.broadcast %96 : vector<1x1xf32> to vector<8x16xf32>
    %98 = arith.mulf %97, %85 : vector<8x16xf32>
    %99 = vector.broadcast %95 : vector<8x1xf32> to vector<8x8xf32>
    %100 = arith.mulf %68, %99 : vector<8x8xf32>
    %cst_30 = arith.constant dense<0.000000e+00> : vector<8x16xf32>
    %101 = tpu.matmul %100, %70, %cst_30 {dimension_numbers = #tpu.dot_dimension_numbers<[0], [0], [1], [1], [0, 1, 1, 1], [], []>} : vector<8x8xf32>, vector<8x16xf32>, vector<8x16xf32> -> vector<8x16xf32>
    %102 = arith.addf %98, %101 : vector<8x16xf32>
    %c1_31 = arith.constant 1 : index
    %c0_32 = arith.constant 0 : index
    %c0_33 = arith.constant 0 : index
    %103 = vector.load %arg8[%c1_31, %c0_32, %c0_33] : memref<2x8x16xf32, #tpu.memory_space<vmem>>, vector<1x8x16xf32>
    %104 = vector.shape_cast %103 : vector<1x8x16xf32> to vector<8x16xf32>
    %105 = vector.shape_cast %102 : vector<8x16xf32> to vector<1x8x16xf32>
    tpu.vector_store %arg8[%c1_31, %c0_32, %c0_33], %105 {strides = array<i32>} : memref<2x8x16xf32, #tpu.memory_space<vmem>>, vector<1x8x16xf32>,
    %106 = tpu.concatenate %52, %90 in 1 : vector<8x16xf32>, vector<8x16xf32> -> vector<8x32xf32>
    %c0_34 = arith.constant 0 : index
    %c0_35 = arith.constant 0 : index
    %107 = vector.load %arg5[%c0_34, %c0_35] : memref<1x32xf32, #tpu.memory_space<vmem>>, vector<1x32xf32>
    %108 = vector.broadcast %107 : vector<1x32xf32> to vector<8x32xf32>
    %109 = arith.mulf %108, %6 : vector<8x32xf32>
    %110 = arith.addf %106, %109 : vector<8x32xf32>
    %c0_36 = arith.constant 0 : index
    %c0_37 = arith.constant 0 : index
    %c0_38 = arith.constant 0 : index
    %111 = vector.load %arg4[%c0_36, %c0_37, %c0_38] : memref<1x8x32xbf16, #tpu.memory_space<vmem>>, vector<1x8x32xbf16>
    %112 = vector.shape_cast %111 : vector<1x8x32xbf16> to vector<8x32xbf16>
    %113 = arith.extf %112 : vector<8x32xbf16> to vector<8x32xf32>
    %c0_39 = arith.constant 0 : index
    %c0_40 = arith.constant 0 : index
    %114 = vector.load %arg6[%c0_39, %c0_40] : memref<1x32xf32, #tpu.memory_space<vmem>>, vector<1x32xf32>
    %115 = vector.broadcast %114 : vector<1x32xf32> to vector<8x32xf32>
    %116 = arith.addf %113, %115 : vector<8x32xf32>
    %117 = arith.negf %116 : vector<8x32xf32>
    %118 = math.exp %117 : vector<8x32xf32>
    %cst_41 = arith.constant 1.000000e+00 : f32
    %119 = vector.broadcast %cst_41 : f32 to vector<8x32xf32>
    %120 = arith.addf %119, %118 : vector<8x32xf32>
    %121 = arith.divf %119, %120 : vector<8x32xf32>
    %122 = arith.mulf %116, %121 : vector<8x32xf32>
    %123 = arith.mulf %110, %122 : vector<8x32xf32>
    %124 = arith.truncf %123 : vector<8x32xf32> to vector<8x32xbf16>
    %c0_42 = arith.constant 0 : index
    %c0_43 = arith.constant 0 : index
    %c0_44 = arith.constant 0 : index
    %125 = vector.load %arg7[%c0_42, %c0_43, %c0_44] : memref<1x8x32xbf16, #tpu.memory_space<vmem>>, vector<1x8x32xbf16>
    %126 = vector.shape_cast %125 : vector<1x8x32xbf16> to vector<8x32xbf16>
    %127 = vector.shape_cast %124 : vector<8x32xbf16> to vector<1x8x32xbf16>
    tpu.vector_store %arg7[%c0_42, %c0_43, %c0_44], %127 {strides = array<i32>} : memref<1x8x32xbf16, #tpu.memory_space<vmem>>, vector<1x8x32xbf16>,
    return
  }
  func.func @transform_0(%arg0: i32, %arg1: i32) -> (i32, i32, i32) {
    %c0_i32 = arith.constant 0 : i32
    %c0_i32_0 = arith.constant 0 : i32
    return %arg0, %arg1, %c0_i32 : i32, i32, i32
  }
  func.func @transform_1(%arg0: i32, %arg1: i32) -> (i32, i32, i32) {
    %c0_i32 = arith.constant 0 : i32
    %c0_i32_0 = arith.constant 0 : i32
    return %arg0, %arg1, %c0_i32 : i32, i32, i32
  }
  func.func @transform_2(%arg0: i32, %arg1: i32) -> (i32, i32, i32) {
    %c0_i32 = arith.constant 0 : i32
    %c0_i32_0 = arith.constant 0 : i32
    return %arg0, %arg1, %c0_i32 : i32, i32, i32
  }
  func.func @transform_3(%arg0: i32, %arg1: i32) -> (i32, i32) {
    %c0_i32 = arith.constant 0 : i32
    %c0_i32_0 = arith.constant 0 : i32
    %c0_i32_1 = arith.constant 0 : i32
    return %c0_i32, %c0_i32_0 : i32, i32
  }
  func.func @transform_4(%arg0: i32, %arg1: i32) -> (i32, i32) {
    %c0_i32 = arith.constant 0 : i32
    %c0_i32_0 = arith.constant 0 : i32
    %c0_i32_1 = arith.constant 0 : i32
    return %c0_i32, %c0_i32_0 : i32, i32
  }
  func.func @transform_5(%arg0: i32, %arg1: i32) -> (i32, i32, i32) {
    %c0_i32 = arith.constant 0 : i32
    %c0_i32_0 = arith.constant 0 : i32
    return %arg0, %arg1, %c0_i32 : i32, i32, i32
  }
}

module attributes {stable_mosaic.version = 11 : i64} {
  func.func @_matmul_kernel(%arg0: i32, %arg1: i32, %arg2: i32, %arg3: memref<32x32xbf16, #tpu.memory_space<vmem>>, %arg4: memref<32x32xbf16, #tpu.memory_space<vmem>>, %arg5: memref<32x32xbf16, #tpu.memory_space<vmem>>, %arg6: memref<32x32xf32, #tpu.memory_space<vmem>>) attributes {dimension_semantics = [#tpu.dimension_semantics<parallel>, #tpu.dimension_semantics<parallel>, #tpu.dimension_semantics<arbitrary>], iteration_bounds = array<i64: 1, 1, 1>, scalar_prefetch = 0 : i64, scratch_operands = 1 : i64, tpu.core_type = #tpu.core_type<tc>, window_params = [{transform_indices = @transform_0, window_bounds = array<i64: 32, 32>}, {transform_indices = @transform_1, window_bounds = array<i64: 32, 32>}, {transform_indices = @transform_2, window_bounds = array<i64: 32, 32>}]} {
    %c0_i32 = arith.constant 0 : i32
    %0 = arith.cmpi eq, %arg2, %c0_i32 : i32
    %1 = arith.extui %0 : i1 to i32
    %c0_i32_0 = arith.constant 0 : i32
    %2 = arith.cmpi ne, %1, %c0_i32_0 : i32
    scf.if %2 {
      %cst_10 = arith.constant 0.000000e+00 : f32
      %12 = vector.broadcast %cst_10 : f32 to vector<32x32xf32>
      %c0_11 = arith.constant 0 : index
      %c0_12 = arith.constant 0 : index
      %13 = vector.load %arg6[%c0_11, %c0_12] : memref<32x32xf32, #tpu.memory_space<vmem>>, vector<32x32xf32>
      tpu.vector_store %arg6[%c0_11, %c0_12], %12 {strides = array<i32>} : memref<32x32xf32, #tpu.memory_space<vmem>>, vector<32x32xf32>,
    } else {
    }
    %c0 = arith.constant 0 : index
    %c0_1 = arith.constant 0 : index
    %3 = vector.load %arg6[%c0, %c0_1] : memref<32x32xf32, #tpu.memory_space<vmem>>, vector<32x32xf32>
    %c0_2 = arith.constant 0 : index
    %c0_3 = arith.constant 0 : index
    %4 = vector.load %arg3[%c0_2, %c0_3] : memref<32x32xbf16, #tpu.memory_space<vmem>>, vector<32x32xbf16>
    %c0_4 = arith.constant 0 : index
    %c0_5 = arith.constant 0 : index
    %5 = vector.load %arg4[%c0_4, %c0_5] : memref<32x32xbf16, #tpu.memory_space<vmem>>, vector<32x32xbf16>
    %cst = arith.constant dense<0.000000e+00> : vector<32x32xf32>
    %6 = tpu.matmul %4, %5, %cst {dimension_numbers = #tpu.dot_dimension_numbers<[1], [0], [0], [1], [0, 0, 1, 1], [], []>} : vector<32x32xbf16>, vector<32x32xbf16>, vector<32x32xf32> -> vector<32x32xf32>
    %7 = arith.addf %3, %6 : vector<32x32xf32>
    %c0_6 = arith.constant 0 : index
    %c0_7 = arith.constant 0 : index
    %8 = vector.load %arg6[%c0_6, %c0_7] : memref<32x32xf32, #tpu.memory_space<vmem>>, vector<32x32xf32>
    tpu.vector_store %arg6[%c0_6, %c0_7], %7 {strides = array<i32>} : memref<32x32xf32, #tpu.memory_space<vmem>>, vector<32x32xf32>,
    %c0_i32_8 = arith.constant 0 : i32
    %9 = arith.cmpi eq, %arg2, %c0_i32_8 : i32
    %10 = arith.extui %9 : i1 to i32
    %c0_i32_9 = arith.constant 0 : i32
    %11 = arith.cmpi ne, %10, %c0_i32_9 : i32
    scf.if %11 {
      %c0_10 = arith.constant 0 : index
      %c0_11 = arith.constant 0 : index
      %12 = vector.load %arg6[%c0_10, %c0_11] : memref<32x32xf32, #tpu.memory_space<vmem>>, vector<32x32xf32>
      %13 = arith.truncf %12 : vector<32x32xf32> to vector<32x32xbf16>
      %c0_12 = arith.constant 0 : index
      %c0_13 = arith.constant 0 : index
      %14 = vector.load %arg5[%c0_12, %c0_13] : memref<32x32xbf16, #tpu.memory_space<vmem>>, vector<32x32xbf16>
      tpu.vector_store %arg5[%c0_12, %c0_13], %13 {strides = array<i32>} : memref<32x32xbf16, #tpu.memory_space<vmem>>, vector<32x32xbf16>,
    } else {
    }
    return
  }
  func.func @transform_0(%arg0: i32, %arg1: i32, %arg2: i32) -> (i32, i32) {
    %c0_i32 = arith.constant 0 : i32
    return %arg0, %arg2 : i32, i32
  }
  func.func @transform_1(%arg0: i32, %arg1: i32, %arg2: i32) -> (i32, i32) {
    %c0_i32 = arith.constant 0 : i32
    return %arg2, %arg1 : i32, i32
  }
  func.func @transform_2(%arg0: i32, %arg1: i32, %arg2: i32) -> (i32, i32) {
    %c0_i32 = arith.constant 0 : i32
    return %arg0, %arg1 : i32, i32
  }
}

module attributes {stable_mosaic.version = 11 : i64} {
  func.func @_rms_mlp_kernel(%arg0: i32, %arg1: i32, %arg2: memref<32x32xbf16, #tpu.memory_space<vmem>>, %arg3: memref<1x32xf32, #tpu.memory_space<vmem>>, %arg4: memref<32x64xbf16, #tpu.memory_space<vmem>>, %arg5: memref<32x64xbf16, #tpu.memory_space<vmem>>, %arg6: memref<64x32xbf16, #tpu.memory_space<vmem>>, %arg7: memref<32x32xbf16, #tpu.memory_space<vmem>>, %arg8: memref<32x32xf32, #tpu.memory_space<vmem>>) attributes {dimension_semantics = [#tpu.dimension_semantics<parallel>, #tpu.dimension_semantics<arbitrary>], iteration_bounds = array<i64: 1, 1>, scalar_prefetch = 0 : i64, scratch_operands = 1 : i64, tpu.core_type = #tpu.core_type<tc>, window_params = [{transform_indices = @transform_0, window_bounds = array<i64: 32, 32>}, {pipeline_mode = #tpu.pipeline_mode<synchronous>, transform_indices = @transform_1, window_bounds = array<i64: 1, 32>}, {transform_indices = @transform_2, window_bounds = array<i64: 32, 64>}, {transform_indices = @transform_3, window_bounds = array<i64: 32, 64>}, {transform_indices = @transform_4, window_bounds = array<i64: 64, 32>}, {transform_indices = @transform_5, window_bounds = array<i64: 32, 32>}]} {
    %c0_i32 = arith.constant 0 : i32
    %0 = arith.cmpi eq, %arg1, %c0_i32 : i32
    %1 = arith.extui %0 : i1 to i32
    %c0_i32_0 = arith.constant 0 : i32
    %2 = arith.cmpi ne, %1, %c0_i32_0 : i32
    scf.if %2 {
      %cst_22 = arith.constant 0.000000e+00 : f32
      %39 = vector.broadcast %cst_22 : f32 to vector<32x32xf32>
      %c0_23 = arith.constant 0 : index
      %c0_24 = arith.constant 0 : index
      %40 = vector.load %arg8[%c0_23, %c0_24] : memref<32x32xf32, #tpu.memory_space<vmem>>, vector<32x32xf32>
      tpu.vector_store %arg8[%c0_23, %c0_24], %39 {strides = array<i32>} : memref<32x32xf32, #tpu.memory_space<vmem>>, vector<32x32xf32>,
    } else {
    }
    %c0 = arith.constant 0 : index
    %c0_1 = arith.constant 0 : index
    %3 = vector.load %arg2[%c0, %c0_1] : memref<32x32xbf16, #tpu.memory_space<vmem>>, vector<32x32xbf16>
    %4 = arith.extf %3 : vector<32x32xbf16> to vector<32x32xf32>
    %5 = arith.mulf %4, %4 : vector<32x32xf32>
    %cst = arith.constant dense<0.000000e+00> : vector<32xf32>
    %6 = vector.multi_reduction <add>, %5, %cst [1] : vector<32x32xf32> to vector<32xf32>
    %7 = vector.shape_cast %6 : vector<32xf32> to vector<32x1xf32>
    %cst_2 = arith.constant 3.200000e+01 : f32
    %8 = vector.broadcast %cst_2 : f32 to vector<32x1xf32>
    %9 = arith.divf %7, %8 : vector<32x1xf32>
    %cst_3 = arith.constant 9.99999974E-6 : f32
    %10 = vector.broadcast %cst_3 : f32 to vector<32x1xf32>
    %11 = arith.addf %9, %10 : vector<32x1xf32>
    %12 = math.rsqrt %11 : vector<32x1xf32>
    %13 = vector.broadcast %12 : vector<32x1xf32> to vector<32x32xf32>
    %14 = arith.mulf %4, %13 : vector<32x32xf32>
    %c0_4 = arith.constant 0 : index
    %c0_5 = arith.constant 0 : index
    %15 = vector.load %arg3[%c0_4, %c0_5] : memref<1x32xf32, #tpu.memory_space<vmem>>, vector<1x32xf32>
    %16 = vector.broadcast %15 : vector<1x32xf32> to vector<32x32xf32>
    %17 = arith.mulf %14, %16 : vector<32x32xf32>
    %18 = arith.truncf %17 : vector<32x32xf32> to vector<32x32xbf16>
    %c0_6 = arith.constant 0 : index
    %c0_7 = arith.constant 0 : index
    %19 = vector.load %arg4[%c0_6, %c0_7] : memref<32x64xbf16, #tpu.memory_space<vmem>>, vector<32x64xbf16>
    %cst_8 = arith.constant dense<0.000000e+00> : vector<32x64xf32>
    %20 = tpu.matmul %18, %19, %cst_8 {dimension_numbers = #tpu.dot_dimension_numbers<[1], [0], [0], [1], [0, 0, 1, 1], [], []>} : vector<32x32xbf16>, vector<32x64xbf16>, vector<32x64xf32> -> vector<32x64xf32>
    %c0_9 = arith.constant 0 : index
    %c0_10 = arith.constant 0 : index
    %21 = vector.load %arg5[%c0_9, %c0_10] : memref<32x64xbf16, #tpu.memory_space<vmem>>, vector<32x64xbf16>
    %cst_11 = arith.constant dense<0.000000e+00> : vector<32x64xf32>
    %22 = tpu.matmul %18, %21, %cst_11 {dimension_numbers = #tpu.dot_dimension_numbers<[1], [0], [0], [1], [0, 0, 1, 1], [], []>} : vector<32x32xbf16>, vector<32x64xbf16>, vector<32x64xf32> -> vector<32x64xf32>
    %23 = arith.negf %20 : vector<32x64xf32>
    %24 = math.exp %23 : vector<32x64xf32>
    %cst_12 = arith.constant 1.000000e+00 : f32
    %25 = vector.broadcast %cst_12 : f32 to vector<32x64xf32>
    %26 = arith.addf %25, %24 : vector<32x64xf32>
    %27 = arith.divf %25, %26 : vector<32x64xf32>
    %28 = arith.mulf %20, %27 : vector<32x64xf32>
    %29 = arith.mulf %28, %22 : vector<32x64xf32>
    %c0_13 = arith.constant 0 : index
    %c0_14 = arith.constant 0 : index
    %30 = vector.load %arg8[%c0_13, %c0_14] : memref<32x32xf32, #tpu.memory_space<vmem>>, vector<32x32xf32>
    %31 = arith.truncf %29 : vector<32x64xf32> to vector<32x64xbf16>
    %c0_15 = arith.constant 0 : index
    %c0_16 = arith.constant 0 : index
    %32 = vector.load %arg6[%c0_15, %c0_16] : memref<64x32xbf16, #tpu.memory_space<vmem>>, vector<64x32xbf16>
    %cst_17 = arith.constant dense<0.000000e+00> : vector<32x32xf32>
    %33 = tpu.matmul %31, %32, %cst_17 {dimension_numbers = #tpu.dot_dimension_numbers<[1], [0], [0], [1], [0, 0, 1, 1], [], []>} : vector<32x64xbf16>, vector<64x32xbf16>, vector<32x32xf32> -> vector<32x32xf32>
    %34 = arith.addf %30, %33 : vector<32x32xf32>
    %c0_18 = arith.constant 0 : index
    %c0_19 = arith.constant 0 : index
    %35 = vector.load %arg8[%c0_18, %c0_19] : memref<32x32xf32, #tpu.memory_space<vmem>>, vector<32x32xf32>
    tpu.vector_store %arg8[%c0_18, %c0_19], %34 {strides = array<i32>} : memref<32x32xf32, #tpu.memory_space<vmem>>, vector<32x32xf32>,
    %c0_i32_20 = arith.constant 0 : i32
    %36 = arith.cmpi eq, %arg1, %c0_i32_20 : i32
    %37 = arith.extui %36 : i1 to i32
    %c0_i32_21 = arith.constant 0 : i32
    %38 = arith.cmpi ne, %37, %c0_i32_21 : i32
    scf.if %38 {
      %c0_22 = arith.constant 0 : index
      %c0_23 = arith.constant 0 : index
      %39 = vector.load %arg8[%c0_22, %c0_23] : memref<32x32xf32, #tpu.memory_space<vmem>>, vector<32x32xf32>
      %40 = arith.truncf %39 : vector<32x32xf32> to vector<32x32xbf16>
      %c0_24 = arith.constant 0 : index
      %c0_25 = arith.constant 0 : index
      %41 = vector.load %arg7[%c0_24, %c0_25] : memref<32x32xbf16, #tpu.memory_space<vmem>>, vector<32x32xbf16>
      tpu.vector_store %arg7[%c0_24, %c0_25], %40 {strides = array<i32>} : memref<32x32xbf16, #tpu.memory_space<vmem>>, vector<32x32xbf16>,
    } else {
    }
    return
  }
  func.func @transform_0(%arg0: i32, %arg1: i32) -> (i32, i32) {
    %c0_i32 = arith.constant 0 : i32
    %c0_i32_0 = arith.constant 0 : i32
    return %arg0, %c0_i32 : i32, i32
  }
  func.func @transform_1(%arg0: i32, %arg1: i32) -> (i32, i32) {
    %c0_i32 = arith.constant 0 : i32
    %c0_i32_0 = arith.constant 0 : i32
    %c0_i32_1 = arith.constant 0 : i32
    return %c0_i32, %c0_i32_0 : i32, i32
  }
  func.func @transform_2(%arg0: i32, %arg1: i32) -> (i32, i32) {
    %c0_i32 = arith.constant 0 : i32
    %c0_i32_0 = arith.constant 0 : i32
    return %c0_i32, %arg1 : i32, i32
  }
  func.func @transform_3(%arg0: i32, %arg1: i32) -> (i32, i32) {
    %c0_i32 = arith.constant 0 : i32
    %c0_i32_0 = arith.constant 0 : i32
    return %c0_i32, %arg1 : i32, i32
  }
  func.func @transform_4(%arg0: i32, %arg1: i32) -> (i32, i32) {
    %c0_i32 = arith.constant 0 : i32
    %c0_i32_0 = arith.constant 0 : i32
    return %arg1, %c0_i32 : i32, i32
  }
  func.func @transform_5(%arg0: i32, %arg1: i32) -> (i32, i32) {
    %c0_i32 = arith.constant 0 : i32
    %c0_i32_0 = arith.constant 0 : i32
    return %arg0, %c0_i32 : i32, i32
  }
}

module attributes {stable_mosaic.version = 11 : i64} {
  func.func @_rmsnorm_kernel(%arg0: i32, %arg1: memref<32x32xbf16, #tpu.memory_space<vmem>>, %arg2: memref<1x32xf32, #tpu.memory_space<vmem>>, %arg3: memref<32x32xf32, #tpu.memory_space<vmem>>) attributes {dimension_semantics = [#tpu.dimension_semantics<parallel>], iteration_bounds = array<i64: 1>, scalar_prefetch = 0 : i64, scratch_operands = 0 : i64, tpu.core_type = #tpu.core_type<tc>, window_params = [{transform_indices = @transform_0, window_bounds = array<i64: 32, 32>}, {pipeline_mode = #tpu.pipeline_mode<synchronous>, transform_indices = @transform_1, window_bounds = array<i64: 1, 32>}, {transform_indices = @transform_2, window_bounds = array<i64: 32, 32>}]} {
    %c0 = arith.constant 0 : index
    %c0_0 = arith.constant 0 : index
    %0 = vector.load %arg1[%c0, %c0_0] : memref<32x32xbf16, #tpu.memory_space<vmem>>, vector<32x32xbf16>
    %1 = arith.extf %0 : vector<32x32xbf16> to vector<32x32xf32>
    %2 = arith.mulf %1, %1 : vector<32x32xf32>
    %cst = arith.constant dense<0.000000e+00> : vector<32xf32>
    %3 = vector.multi_reduction <add>, %2, %cst [1] : vector<32x32xf32> to vector<32xf32>
    %4 = vector.shape_cast %3 : vector<32xf32> to vector<32x1xf32>
    %cst_1 = arith.constant 3.200000e+01 : f32
    %5 = vector.broadcast %cst_1 : f32 to vector<32x1xf32>
    %6 = arith.divf %4, %5 : vector<32x1xf32>
    %cst_2 = arith.constant 9.99999974E-6 : f32
    %7 = vector.broadcast %cst_2 : f32 to vector<32x1xf32>
    %8 = arith.addf %6, %7 : vector<32x1xf32>
    %9 = math.rsqrt %8 : vector<32x1xf32>
    %10 = vector.broadcast %9 : vector<32x1xf32> to vector<32x32xf32>
    %11 = arith.mulf %1, %10 : vector<32x32xf32>
    %c0_3 = arith.constant 0 : index
    %c0_4 = arith.constant 0 : index
    %12 = vector.load %arg2[%c0_3, %c0_4] : memref<1x32xf32, #tpu.memory_space<vmem>>, vector<1x32xf32>
    %13 = vector.broadcast %12 : vector<1x32xf32> to vector<32x32xf32>
    %14 = arith.mulf %11, %13 : vector<32x32xf32>
    %c0_5 = arith.constant 0 : index
    %c0_6 = arith.constant 0 : index
    %15 = vector.load %arg3[%c0_5, %c0_6] : memref<32x32xf32, #tpu.memory_space<vmem>>, vector<32x32xf32>
    tpu.vector_store %arg3[%c0_5, %c0_6], %14 {strides = array<i32>} : memref<32x32xf32, #tpu.memory_space<vmem>>, vector<32x32xf32>,
    return
  }
  func.func @transform_0(%arg0: i32) -> (i32, i32) {
    %c0_i32 = arith.constant 0 : i32
    %c0_i32_0 = arith.constant 0 : i32
    return %arg0, %c0_i32 : i32, i32
  }
  func.func @transform_1(%arg0: i32) -> (i32, i32) {
    %c0_i32 = arith.constant 0 : i32
    %c0_i32_0 = arith.constant 0 : i32
    %c0_i32_1 = arith.constant 0 : i32
    return %c0_i32, %c0_i32_0 : i32, i32
  }
  func.func @transform_2(%arg0: i32) -> (i32, i32) {
    %c0_i32 = arith.constant 0 : i32
    %c0_i32_0 = arith.constant 0 : i32
    return %arg0, %c0_i32 : i32, i32
  }
}

</mosaic_0001>

<llo_original>
// kernel: mixer_model_forward.12
$region0: #{mixer_model_forward.12}
  #allocation0 [shape = 'u32[]', space=smem, size = 0x4, offset = 0x4, fixed_abs, tag = 'smem constant byte address 0x4 - core index']
  #allocation1 [shape = 'u32[72,128]{1,0:T(1,128)}', space=vmem, size = 0x9000, scoped, tag = 'internal scratch']
  #allocation2 [shape = 'f32[11,64]{1,0:T(8,128)}', space=vmem, size = 0x2000, scoped, tag = 'scratch operand']
  %s0 = inlined_call_operand.vmem [shape: bf16[2,16,64], index: 0, kind: input, shape index: {}]
  %s1 = inlined_call_operand.vmem [shape: f32[4,64], index: 1, kind: input, shape index: {}]
  %s2 = inlined_call_operand.vmem [shape: f32[1,64], index: 2, kind: input, shape index: {}]
  %s3 = inlined_call_operand.vmem [shape: bf16[2,16,64], index: 3, kind: output, shape index: {}]
  %s4 = sld [smem:[#allocation0]]
  $region49: #{mixer_model_forward.12} parent=0
    _
  %s6 = ssub.s32 1, %s4
  %s7 = scalar_select 0, %s6, %s4
  loop: start=0, step=1, limit=6
  $region2: #{mixer_model_forward.12} parent=0 // loop_pre_header
    _
  $region3: #{mixer_model_forward.12} parent=0 // loop_header
    %s9 = sphi 0, %s13
    %p10 = scmp.ge.s32.totalorder %s9, 6
    %s16 = sphi 0, %s28
    %s17 = sphi 0, %s24
    %s18 = sphi 0, %s16
    %s19 = sphi 0, %s17
    %s20 = sphi 0, %s18
    %s21 = sphi 0, %s19
    %s33 = sphi 0, %s35
    %s36 = sphi 0, %s33
    %s37 = sphi 0, %s36
    %s53 = sphi 0, %s37
    %s57 = sphi 0, %s57
    %s59 = sphi 0, %s57
    %s60 = sphi 0, %s59
    %s74 = sphi 0, %s60
    %s78 = sphi 0, %s78
    %s80 = sphi 0, %s78
    %s81 = sphi 0, %s80
    %s95 = sphi 0, %s81
    %s103 = sphi 0, %s105
    %s106 = sphi 0, %s103
    %s107 = sphi 0, %s106
    %s123 = sphi 0, %s107
  $region4: #{mixer_model_forward.12} parent=0 // loop_header_branch
    %12 = sbr.rel (%p10) target = $region8
  $region5: #{mixer_model_forward.12} parent=0 // loop_body
    %s14 = ssub.s32 %s9, 1
    %s15 = ssub.s32 %s9, 2
    %s22 = sadd.s32 1, %s17
    %p23 = scmp.ge.s32.totalorder %s22, 2
    %s24 = scalar_select %p23, 0, %s22
    %s25 = sadd.s32 1, %s16
    %s26 = scalar_select %p23, %s25, %s16
    %p27 = scmp.ge.s32.totalorder %s26, 2
    %s28 = scalar_select %p27, 0, %s26
    %s29 = ssub.s32 %s16, %s28
    %s30 = ssub.s32 %s17, %s24
    %s31 = sor.u32 %s29, %s30
    %p32 = scmp.eq.s32.totalorder %s31, 0
    %s34 = sadd.s32 %s33, 1
    %s35 = scalar_select %p32, %s33, %s34
    %p38 = pneg %p32
    %p39 = scmp.eq.s32.totalorder %s9, 3
    %p40 = por %p38, %p39
    %p41 = scmp.ne.s32.totalorder %s33, %s36
    %p42 = scmp.eq.s32.totalorder %s9, 0
    %p43 = por %p41, %p42
    %p44 = scmp.ne.s32.totalorder %s33, %s36
    %p45 = scmp.eq.s32.totalorder %s14, 3
    %p46 = por %p44, %p45
    %p47 = scmp.ne.s32.totalorder %s36, %s37
    %p48 = scmp.eq.s32.totalorder %s14, 0
    %p49 = por %p47, %p48
    %p50 = scmp.ne.s32.totalorder %s36, %s37
    %p51 = scmp.eq.s32.totalorder %s15, 3
    %p52 = por %p50, %p51
    %p54 = scmp.ne.s32.totalorder %s37, %s53
    %p55 = scmp.eq.s32.totalorder %s15, 0
    %p56 = por %p54, %p55
    %s58 = sadd.s32 %s57, 1
    %p61 = scmp.eq.s32.totalorder %s9, 3
    %p62 = scmp.ne.s32.totalorder %s57, %s59
    %p63 = scmp.eq.s32.totalorder %s9, 0
    %p64 = por %p62, %p63
    %p65 = scmp.ne.s32.totalorder %s57, %s59
    %p66 = scmp.eq.s32.totalorder %s14, 3
    %p67 = por %p65, %p66
    %p68 = scmp.ne.s32.totalorder %s59, %s60
    %p69 = scmp.eq.s32.totalorder %s14, 0
    %p70 = por %p68, %p69
    %p71 = scmp.ne.s32.totalorder %s59, %s60
    %p72 = scmp.eq.s32.totalorder %s15, 3
    %p73 = por %p71, %p72
    %p75 = scmp.ne.s32.totalorder %s60, %s74
    %p76 = scmp.eq.s32.totalorder %s15, 0
    %p77 = por %p75, %p76
    %s79 = sadd.s32 %s78, 1
    %p82 = scmp.eq.s32.totalorder %s9, 3
    %p83 = scmp.ne.s32.totalorder %s78, %s80
    %p84 = scmp.eq.s32.totalorder %s9, 0
    %p85 = por %p83, %p84
    %p86 = scmp.ne.s32.totalorder %s78, %s80
    %p87 = scmp.eq.s32.totalorder %s14, 3
    %p88 = por %p86, %p87
    %p89 = scmp.ne.s32.totalorder %s80, %s81
    %p90 = scmp.eq.s32.totalorder %s14, 0
    %p91 = por %p89, %p90
    %p92 = scmp.ne.s32.totalorder %s80, %s81
    %p93 = scmp.eq.s32.totalorder %s15, 3
    %p94 = por %p92, %p93
    %p96 = scmp.ne.s32.totalorder %s81, %s95
    %p97 = scmp.eq.s32.totalorder %s15, 0
    %p98 = por %p96, %p97
    %s99 = ssub.s32 %s16, %s28
    %s100 = ssub.s32 %s17, %s24
    %s101 = sor.u32 %s99, %s100
    %p102 = scmp.eq.s32.totalorder %s101, 0
    %s104 = sadd.s32 %s103, 1
    %s105 = scalar_select %p102, %s103, %s104
    %p108 = pneg %p102
    %p109 = scmp.eq.s32.totalorder %s9, 3
    %p110 = por %p108, %p109
    %p111 = scmp.ne.s32.totalorder %s103, %s106
    %p112 = scmp.eq.s32.totalorder %s9, 0
    %p113 = por %p111, %p112
    %p114 = scmp.ne.s32.totalorder %s103, %s106
    %p115 = scmp.eq.s32.totalorder %s14, 3
    %p116 = por %p114, %p115
    %p117 = scmp.ne.s32.totalorder %s106, %s107
    %p118 = scmp.eq.s32.totalorder %s14, 0
    %p119 = por %p117, %p118
    %p120 = scmp.ne.s32.totalorder %s106, %s107
    %p121 = scmp.eq.s32.totalorder %s15, 3
    %p122 = por %p120, %p121
    %p124 = scmp.ne.s32.totalorder %s107, %s123
    %p125 = scmp.eq.s32.totalorder %s15, 0
    %p126 = por %p124, %p125
    %p127 = scmp.le.s32.totalorder 1, %s9
    %p128 = scmp.lt.s32.totalorder %s9, 5
    %p129 = pnand %p127, %p128
    %p130 = pneg %p129
    // Predicated region
    $region9: #{mixer_model_forward.12} parent=5 // pred_check
      _
    $region10: #{mixer_model_forward.12} parent=5 // pred_check_branch
      %132 = sbr.rel (%p129) target = $region12
    $region11: #{mixer_model_forward.12} parent=5 // pred_region
      %s133 = ssub.s32 %s9, 1
      // Predicated region
      $region13: #{mixer_model_forward.12} parent=11 // pred_check
        %p134 = pneg %p70
      $region14: #{mixer_model_forward.12} parent=11 // pred_check_branch
        %136 = sbr.rel (%p134) target = $region16
      $region15: #{mixer_model_forward.12} parent=11 // pred_region
        _
      $region16: #{mixer_model_forward.12} parent=11 // pred_fallthru
        _
      // Predicated region
      $region17: #{mixer_model_forward.12} parent=11 // pred_check
        %p137 = pneg %p91
      $region18: #{mixer_model_forward.12} parent=11 // pred_check_branch
        %139 = sbr.rel (%p137) target = $region20
      $region19: #{mixer_model_forward.12} parent=11 // pred_region
        _
      $region20: #{mixer_model_forward.12} parent=11 // pred_fallthru
        _
    $region12: #{mixer_model_forward.12} parent=5 // pred_fallthru
      _
    %p140 = scmp.lt.s32.totalorder %s9, 4
    // Predicated region
    $region21: #{mixer_model_forward.12} parent=5 // pred_check
      %p141 = pneg %p140
    $region22: #{mixer_model_forward.12} parent=5 // pred_check_branch
      %143 = sbr.rel (%p141) target = $region24
    $region23: #{mixer_model_forward.12} parent=5 // pred_region
      // Predicated region
      $region25: #{mixer_model_forward.12} parent=23 // pred_check
        %p144 = pneg %p43
      $region26: #{mixer_model_forward.12} parent=23 // pred_check_branch
        %146 = sbr.rel (%p144) target = $region28
      $region27: #{mixer_model_forward.12} parent=23 // pred_region
        %p147 = scmp.lt.s32.totalorder %s16, 1
        %s148 = scalar_select %p147, %s16, 1
        %p149 = scmp.lt.s32.totalorder %s17, 1
        %s150 = scalar_select %p149, %s17, 1
        %s151 = smul.addr %s148, 2
        %s152 = sadd.s32 %s150, %s151
        %s153 = smul.addr %s152, 4
        %s154 = scalar_lea.vmem %s0, %s153
      $region28: #{mixer_model_forward.12} parent=23 // pred_fallthru
        _
    $region24: #{mixer_model_forward.12} parent=5 // pred_fallthru
      _
    %p155 = scmp.le.s32.totalorder 1, %s9
    %p156 = scmp.lt.s32.totalorder %s9, 5
    %p157 = pnand %p155, %p156
    %p158 = pneg %p157
    // Predicated region
    $region29: #{mixer_model_forward.12} parent=5 // pred_check
      _
    $region30: #{mixer_model_forward.12} parent=5 // pred_check_branch
      %160 = sbr.rel (%p157) target = $region32
    $region31: #{mixer_model_forward.12} parent=5 // pred_region
      %s161 = ssub.s32 %s9, 1
      %p162 = scmp.lt.s32.totalorder %s18, 1
      %s163 = scalar_select %p162, %s18, 1
      %p164 = scmp.lt.s32.totalorder %s19, 1
      %s165 = scalar_select %p164, %s19, 1
      %s166 = smul.addr %s163, 2
      %s167 = sadd.s32 %s165, %s166
      %s168 = smul.addr %s167, 4
      %s169 = scalar_lea.vmem %s0, %s168
      %p170 = pneg %p49
      %p171 = pneg %p46
      %p172 = pneg %p70
      %p173 = pneg %p67
      %p174 = pneg %p91
      %p175 = pneg %p88
      %p176 = pneg %p119
      %p177 = pneg %p116
      %p178 = scmp.lt.s32.totalorder %s18, 1
      %s179 = scalar_select %p178, %s18, 1
      %p180 = scmp.lt.s32.totalorder %s19, 1
      %s181 = scalar_select %p180, %s19, 1
      %s182 = smul.addr %s179, 2
      %s183 = sadd.s32 %s181, %s182
      %s184 = smul.addr %s183, 4
      %s185 = scalar_lea.vmem %s3, %s184
      %p186 = scmp.lt.s32.totalorder %s18, 1
      %s187 = scalar_select %p186, %s18, 1
      %p188 = scmp.lt.s32.totalorder %s19, 1
      %s189 = scalar_select %p188, %s19, 1
      %s190 = smul.addr %s187, 2
      %s191 = sadd.s32 %s189, %s190
      %s192 = smul.addr %s191, 4
      %s193 = scalar_lea.vmem %s0, %s192
      %p194 = scmp.lt.s32.totalorder %s18, 1
      %s195 = scalar_select %p194, %s18, 1
      %p196 = scmp.lt.s32.totalorder %s19, 1
      %s197 = scalar_select %p196, %s19, 1
      %s198 = smul.addr %s195, 2
      %s199 = sadd.s32 %s197, %s198
      %s200 = smul.addr %s199, 4
      %s201 = scalar_lea.vmem %s3, %s200
      %p202 = scmp.eq.s32.totalorder %s19, 0
      // Predicated region
      $region33: #{mixer_model_forward.12} parent=31 // pred_check
        %p203 = pneg %p202
      $region34: #{mixer_model_forward.12} parent=31 // pred_check_branch
        %205 = sbr.rel (%p203) target = $region36
      $region35: #{mixer_model_forward.12} parent=31 // pred_region
        %vm206 = vcmask 518144
        %207 = vst.msk [vmem:[#allocation2] sm:$0x7] %vm206, 0.0
      $region36: #{mixer_model_forward.12} parent=31 // pred_fallthru
        _
      %v208 = vld [vmem:[%s193] sm:$0xf]
      %v209 = vunpack.c.l.bf16 %v208
      %vm210 = vcmask 523264
      %211 = vst.msk [vmem:[#allocation2 + $0x3] sm:$0xff] %vm210, %v209
      %v212 = vld [vmem:[#allocation2] sm:$0xff]
      %v213 = vld [vmem:[%s1] sm:$0x1]
      %v214 = vperm.slane %v213, 0
      %v215 = vmul.f32 %v212, %v214
      %v216 = vadd.f32 %v215, 0.0
      %v217 = vld [vmem:[#allocation2 + $0x1] sm:$0xff]
      %v218 = vld [vmem:[%s1 + $0x1] sm:$0x1]
      %v219 = vperm.slane %v218, 0
      %v220 = vmul.f32 %v217, %v219
      %v221 = vadd.f32 %v216, %v220
      %v222 = vld [vmem:[#allocation2 + $0x2] sm:$0xff]
      %v223 = vld [vmem:[%s1 + $0x2] sm:$0x1]
      %v224 = vperm.slane %v223, 0
      %v225 = vmul.f32 %v222, %v224
      %v226 = vadd.f32 %v221, %v225
      %v227 = vld [vmem:[#allocation2 + $0x3] sm:$0xff]
      %v228 = vld [vmem:[%s1 + $0x3] sm:$0x1]
      %v229 = vperm.slane %v228, 0
      %v230 = vmul.f32 %v227, %v229
      %v231 = vadd.f32 %v226, %v230
      %v232 = vld [vmem:[%s2] sm:$0x1]
      %v234 = vperm.slane %v232, 0
      %v236 = vadd.f32 %v231, %v234
      %v237 = vpack.c.bf16 %v236, %v236
      %vm238 = vcmask 519168
      %239 = vst.msk [vmem:[%s201] sm:$0xf] %vm238, %v237
      %v240 = vld [vmem:[#allocation2 + $0x8] sm:$0x7]
      %vm241 = vcmask 518144
      %242 = vst.msk [vmem:[#allocation2] sm:$0x7] %vm241, %v240
      %p243 = scmp.lt.s32.totalorder %s18, 1
      %s244 = scalar_select %p243, %s18, 1
      %p245 = scmp.lt.s32.totalorder %s19, 1
      %s246 = scalar_select %p245, %s19, 1
      %s247 = smul.addr %s244, 2
      %s248 = sadd.s32 %s246, %s247
      %s249 = smul.addr %s248, 4
      %s250 = scalar_lea.vmem %s3, %s249
      // Predicated region
      $region37: #{mixer_model_forward.12} parent=31 // pred_check
        %p251 = pneg %p116
      $region38: #{mixer_model_forward.12} parent=31 // pred_check_branch
        %253 = sbr.rel (%p251) target = $region40
      $region39: #{mixer_model_forward.12} parent=31 // pred_region
        _
      $region40: #{mixer_model_forward.12} parent=31 // pred_fallthru
        _
    $region32: #{mixer_model_forward.12} parent=5 // pred_fallthru
      _
    %p254 = scmp.le.s32.totalorder 2, %s9
    // Predicated region
    $region41: #{mixer_model_forward.12} parent=5 // pred_check
      %p255 = pneg %p254
    $region42: #{mixer_model_forward.12} parent=5 // pred_check_branch
      %257 = sbr.rel (%p255) target = $region44
    $region43: #{mixer_model_forward.12} parent=5 // pred_region
      %s258 = ssub.s32 %s9, 2
      // Predicated region
      $region45: #{mixer_model_forward.12} parent=43 // pred_check
        %p259 = pneg %p122
      $region46: #{mixer_model_forward.12} parent=43 // pred_check_branch
        %261 = sbr.rel (%p259) target = $region48
      $region47: #{mixer_model_forward.12} parent=43 // pred_region
        %p262 = scmp.lt.s32.totalorder %s20, 1
        %s263 = scalar_select %p262, %s20, 1
        %p264 = scmp.lt.s32.totalorder %s21, 1
        %s265 = scalar_select %p264, %s21, 1
        %s266 = smul.addr %s263, 2
        %s267 = sadd.s32 %s265, %s266
        %s268 = smul.addr %s267, 4
        %s269 = scalar_lea.vmem %s3, %s268
      $region48: #{mixer_model_forward.12} parent=43 // pred_fallthru
        _
    $region44: #{mixer_model_forward.12} parent=5 // pred_fallthru
      _
  $region6: #{mixer_model_forward.12} parent=0 // loop_footer
    %s13 = sadd.s32 1, %s9
  $region7: #{mixer_model_forward.12} parent=0 // loop_footer_branch
    %8 = sbr.rel target = $region3
  $region8: #{mixer_model_forward.12} parent=0 // loop_exit
    _

// kernel: mixer_model_forward.14
$region0: #{mixer_model_forward.14}
  #allocation0 [shape = 'u32[]', space=smem, size = 0x4, offset = 0x4, fixed_abs, tag = 'smem constant byte address 0x4 - core index']
  #allocation1 [shape = 'u32[72,128]{1,0:T(1,128)}', space=vmem, size = 0x9000, scoped, tag = 'internal scratch']
  #allocation2 [shape = 'f32[32,32]{1,0:T(8,128)}', space=vmem, size = 0x4000, scoped, tag = 'scratch operand']
  %s0 = inlined_call_operand.vmem [shape: bf16[32,32], index: 0, kind: input, shape index: {}]
  %s1 = inlined_call_operand.vmem [shape: bf16[32,32], index: 1, kind: input, shape index: {}]
  %s2 = inlined_call_operand.vmem [shape: bf16[32,32], index: 2, kind: output, shape index: {}]
  %s3 = sld [smem:[#allocation0]]
  $region26: #{mixer_model_forward.14} parent=0
    _
  %s5 = ssub.s32 1, %s3
  %s6 = scalar_select 0, %s5, %s3
  // Predicated region
  $region2: #{mixer_model_forward.14} parent=0 // pred_check
    _
  $region3: #{mixer_model_forward.14} parent=0 // pred_check_branch
    %8 = sbr.rel (0) target = $region5
  $region4: #{mixer_model_forward.14} parent=0 // pred_region
    _
  $region5: #{mixer_model_forward.14} parent=0 // pred_fallthru
    _
  // Predicated region
  $region6: #{mixer_model_forward.14} parent=0 // pred_check
    _
  $region7: #{mixer_model_forward.14} parent=0 // pred_check_branch
    %10 = sbr.rel (0) target = $region9
  $region8: #{mixer_model_forward.14} parent=0 // pred_region
    _
  $region9: #{mixer_model_forward.14} parent=0 // pred_fallthru
    _
  %p12 = scmp.eq.s32.totalorder 0, 0
  // Predicated region
  $region10: #{mixer_model_forward.14} parent=0 // pred_check
    %p13 = pneg %p12
  $region11: #{mixer_model_forward.14} parent=0 // pred_check_branch
    %15 = sbr.rel (%p13) target = $region13
  $region12: #{mixer_model_forward.14} parent=0 // pred_region
    %vm16 = vcmask 261120
    %17 = vst.msk [vmem:[#allocation2] sm:$0xff] %vm16, 0.0
    %18 = vst.msk [vmem:[#allocation2 + $0x8] sm:$0xff] %vm16, 0.0
    %19 = vst.msk [vmem:[#allocation2 + $0x10] sm:$0xff] %vm16, 0.0
    %20 = vst.msk [vmem:[#allocation2 + $0x18] sm:$0xff] %vm16, 0.0
  $region13: #{mixer_model_forward.14} parent=0 // pred_fallthru
    _
  %v21 = vld [vmem:[#allocation2] sm:$0xff]
  %v22 = vld [vmem:[#allocation2 + $0x8] sm:$0xff]
  %v23 = vld [vmem:[#allocation2 + $0x10] sm:$0xff]
  %v24 = vld [vmem:[#allocation2 + $0x18] sm:$0xff]
  %v25 = vld [vmem:[%s0] sm:$0xf]
  %v26 = vld [vmem:[%s0 + $0x4] sm:$0xf]
  %v27 = vld [vmem:[%s0 + $0x8] sm:$0xf]
  %v28 = vld [vmem:[%s0 + $0xc] sm:$0xf]
  %v29 = vld [vmem:[%s1] sm:$0xf]
  %v30 = vld [vmem:[%s1 + $0x4] sm:$0xf]
  %v31 = vld [vmem:[%s1 + $0x8] sm:$0xf]
  %v32 = vld [vmem:[%s1 + $0xc] sm:$0xf]
  %v37 = vunpack.c.l.b16 %v25
  %v38 = vunpack.c.l.b16 %v26
  %v39 = vunpack.c.l.b16 %v27
  %v40 = vunpack.c.l.b16 %v28
  %v41 = vpack.c.b16 %v38, %v37
  %v42 = vpack.c.b16 %v40, %v39
  %v47 = vunpack.c.l.b16 %v29
  %v48 = vunpack.c.l.b16 %v30
  %v49 = vunpack.c.l.b16 %v31
  %v50 = vunpack.c.l.b16 %v32
  %v51 = vpack.c.b16 %v48, %v47
  %v52 = vpack.c.b16 %v50, %v49
  %vm55 = vcmask 261120
  %v57 = vsel %vm55, %v41, 0
  %v60 = vsel %vm55, %v42, 0
  %62 = vmatpush.bf16.msra.mxu0 0
  %63 = vmatpush.bf16.msra.mxu0 0
  %64 = vmatpush.bf16.msra.mxu0 0
  %65 = vmatpush.bf16.msra.mxu0 0
  %66 = vmatpush.bf16.msra.mxu0 0
  %67 = vmatpush.bf16.msra.mxu0 0
  %68 = vmatpush.bf16.msra.mxu0 %v52
  %69 = vmatpush.bf16.msra.mxu0 %v51
  %70 = vmatmul.bf16.gmra.mxu0 %v57
  %v71 = vpop.f32.mrf.mxu0
  %v72 = vadd.f32 0.0, %v71
  %v73 = vpop.f32.mrf.mxu0
  %v74 = vadd.f32 0.0, %v73
  %75 = vmatmul.bf16.gmra.mxu0 %v60
  %v76 = vpop.f32.mrf.mxu0
  %v77 = vadd.f32 0.0, %v76
  %v78 = vpop.f32.mrf.mxu0
  %v79 = vadd.f32 0.0, %v78
  %80 = vdwg.mxu0
  %v81 = vadd.f32 %v21, %v72
  %v82 = vadd.f32 %v22, %v74
  %v83 = vadd.f32 %v23, %v77
  %v84 = vadd.f32 %v24, %v79
  %85 = vst.msk [vmem:[#allocation2] sm:$0xff] %vm55, %v81
  %86 = vst.msk [vmem:[#allocation2 + $0x8] sm:$0xff] %vm55, %v82
  %87 = vst.msk [vmem:[#allocation2 + $0x10] sm:$0xff] %vm55, %v83
  %88 = vst.msk [vmem:[#allocation2 + $0x18] sm:$0xff] %vm55, %v84
  // Predicated region
  $region14: #{mixer_model_forward.14} parent=0 // pred_check
    %p89 = pneg %p12
  $region15: #{mixer_model_forward.14} parent=0 // pred_check_branch
    %91 = sbr.rel (%p89) target = $region17
  $region16: #{mixer_model_forward.14} parent=0 // pred_region
    %v92 = vld [vmem:[#allocation2] sm:$0xff]
    %v93 = vld [vmem:[#allocation2 + $0x8] sm:$0xff]
    %v94 = vld [vmem:[#allocation2 + $0x10] sm:$0xff]
    %v95 = vld [vmem:[#allocation2 + $0x18] sm:$0xff]
    %v96 = vpack.c.bf16 %v92, %v92
    %v97 = vpack.c.bf16 %v93, %v93
    %v98 = vpack.c.bf16 %v94, %v94
    %v99 = vpack.c.bf16 %v95, %v95
    %vm100 = vcmask 257024
    %101 = vst.msk [vmem:[%s2] sm:$0xf] %vm100, %v96
    %102 = vst.msk [vmem:[%s2 + $0x4] sm:$0xf] %vm100, %v97
    %103 = vst.msk [vmem:[%s2 + $0x8] sm:$0xf] %vm100, %v98
    %104 = vst.msk [vmem:[%s2 + $0xc] sm:$0xf] %vm100, %v99
  $region17: #{mixer_model_forward.14} parent=0 // pred_fallthru
    _
  // Predicated region
  $region18: #{mixer_model_forward.14} parent=0 // pred_check
    _
  $region19: #{mixer_model_forward.14} parent=0 // pred_check_branch
    %106 = sbr.rel (0) target = $region21
  $region20: #{mixer_model_forward.14} parent=0 // pred_region
    _
  $region21: #{mixer_model_forward.14} parent=0 // pred_fallthru
    _
  // Predicated region
  $region22: #{mixer_model_forward.14} parent=0 // pred_check
    _
  $region23: #{mixer_model_forward.14} parent=0 // pred_check_branch
    %108 = sbr.rel (0) target = $region25
  $region24: #{mixer_model_forward.14} parent=0 // pred_region
    _
  $region25: #{mixer_model_forward.14} parent=0 // pred_fallthru
    _

// kernel: mixer_model_forward.11
$region0: #{mixer_model_forward.11}
  #allocation0 [shape = 'u32[]', space=smem, size = 0x4, offset = 0x4, fixed_abs, tag = 'smem constant byte address 0x4 - core index']
  #allocation1 [shape = 'u32[72,128]{1,0:T(1,128)}', space=vmem, size = 0x9000, scoped, tag = 'internal scratch']
  %s0 = inlined_call_operand.vmem [shape: bf16[32,32], index: 0, kind: input, shape index: {}]
  %s1 = inlined_call_operand.vmem [shape: f32[1,32], index: 1, kind: input, shape index: {}]
  %s2 = inlined_call_operand.vmem [shape: bf16[32,128], index: 2, kind: input, shape index: {}]
  %s3 = inlined_call_operand.vmem [shape: bf16[32,128], index: 3, kind: output, shape index: {}]
  %s4 = sld [smem:[#allocation0]]
  $region22: #{mixer_model_forward.11} parent=0
    _
  %s6 = ssub.s32 1, %s4
  %s7 = scalar_select 0, %s6, %s4
  // Predicated region
  $region2: #{mixer_model_forward.11} parent=0 // pred_check
    _
  $region3: #{mixer_model_forward.11} parent=0 // pred_check_branch
    %9 = sbr.rel (0) target = $region5
  $region4: #{mixer_model_forward.11} parent=0 // pred_region
    _
  $region5: #{mixer_model_forward.11} parent=0 // pred_fallthru
    _
  // Predicated region
  $region6: #{mixer_model_forward.11} parent=0 // pred_check
    _
  $region7: #{mixer_model_forward.11} parent=0 // pred_check_branch
    %11 = sbr.rel (0) target = $region9
  $region8: #{mixer_model_forward.11} parent=0 // pred_region
    _
  $region9: #{mixer_model_forward.11} parent=0 // pred_fallthru
    _
  // Predicated region
  $region10: #{mixer_model_forward.11} parent=0 // pred_check
    _
  $region11: #{mixer_model_forward.11} parent=0 // pred_check_branch
    %13 = sbr.rel (0) target = $region13
  $region12: #{mixer_model_forward.11} parent=0 // pred_region
    _
  $region13: #{mixer_model_forward.11} parent=0 // pred_fallthru
    _
  %v15 = vld [vmem:[%s0] sm:$0xf]
  %v16 = vld [vmem:[%s0 + $0x4] sm:$0xf]
  %v17 = vld [vmem:[%s0 + $0x8] sm:$0xf]
  %v18 = vld [vmem:[%s0 + $0xc] sm:$0xf]
  %v19 = vunpack.c.l.bf16 %v15
  %v20 = vunpack.c.l.bf16 %v16
  %v21 = vunpack.c.l.bf16 %v17
  %v22 = vunpack.c.l.bf16 %v18
  %v23 = vmul.f32 %v19, %v19
  %v24 = vmul.f32 %v20, %v20
  %v25 = vmul.f32 %v21, %v21
  %v26 = vmul.f32 %v22, %v22
  %vm27 = vcmask 261120
  %v28 = vsel %vm27, %v23, 0.0
  %29 = vadd.xlane.f32.xlu0 %v28
  %v30 = vpop.xlane.xlu0 %29
  %v31 = vsel %vm27, %v24, 0.0
  %32 = vadd.xlane.f32.xlu0 %v31
  %v33 = vpop.xlane.xlu0 %32
  %v34 = vsel %vm27, %v25, 0.0
  %35 = vadd.xlane.f32.xlu0 %v34
  %v36 = vpop.xlane.xlu0 %35
  %v37 = vsel %vm27, %v26, 0.0
  %38 = vadd.xlane.f32.xlu0 %v37
  %v39 = vpop.xlane.xlu0 %38
  %v40 = vrcp.pop 32.0
  %v41 = vmul.f32 32.0, %v40
  %v42 = vsub.f32 1.0, %v41
  %v43 = vmul.f32 %v40, %v42
  %v44 = vadd.f32 %v40, %v43
  %vm45 = vweird.f32 %v40
  %v46 = vsel %vm45, %v40, %v44
  %v47 = vmul.f32 %v30, %v46
  %v48 = vmul.f32 %v33, %v46
  %v49 = vmul.f32 %v36, %v46
  %v50 = vmul.f32 %v39, %v46
  %v51 = vadd.f32 %v47, 1e-05
  %v52 = vadd.f32 %v48, 1e-05
  %v53 = vadd.f32 %v49, 1e-05
  %v54 = vadd.f32 %v50, 1e-05
  %v55 = vrsqrt.pop %v51
  %v56 = vmul.f32 %v55, %v51
  %v57 = vmul.f32 %v56, %v55
  %v58 = vmul.f32 0.5, %v57
  %v59 = vsub.f32 1.5, %v58
  %v60 = vmul.f32 %v55, %v59
  %vm61 = vweird.f32 %v51
  %vm62 = vweird.f32 %v55
  %vm63 = vmor %vm61, %vm62
  %v64 = vsel %vm63, %v55, %v60
  %v65 = vrsqrt.pop %v52
  %v66 = vmul.f32 %v65, %v52
  %v67 = vmul.f32 %v66, %v65
  %v68 = vmul.f32 0.5, %v67
  %v69 = vsub.f32 1.5, %v68
  %v70 = vmul.f32 %v65, %v69
  %vm71 = vweird.f32 %v52
  %vm72 = vweird.f32 %v65
  %vm73 = vmor %vm71, %vm72
  %v74 = vsel %vm73, %v65, %v70
  %v75 = vrsqrt.pop %v53
  %v76 = vmul.f32 %v75, %v53
  %v77 = vmul.f32 %v76, %v75
  %v78 = vmul.f32 0.5, %v77
  %v79 = vsub.f32 1.5, %v78
  %v80 = vmul.f32 %v75, %v79
  %vm81 = vweird.f32 %v53
  %vm82 = vweird.f32 %v75
  %vm83 = vmor %vm81, %vm82
  %v84 = vsel %vm83, %v75, %v80
  %v85 = vrsqrt.pop %v54
  %v86 = vmul.f32 %v85, %v54
  %v87 = vmul.f32 %v86, %v85
  %v88 = vmul.f32 0.5, %v87
  %v89 = vsub.f32 1.5, %v88
  %v90 = vmul.f32 %v85, %v89
  %vm91 = vweird.f32 %v54
  %vm92 = vweird.f32 %v85
  %vm93 = vmor %vm91, %vm92
  %v94 = vsel %vm93, %v85, %v90
  %v95 = vmul.f32 %v19, %v64
  %v96 = vmul.f32 %v20, %v74
  %v97 = vmul.f32 %v21, %v84
  %v98 = vmul.f32 %v22, %v94
  %v99 = vld [vmem:[%s1] sm:$0x1]
  %v101 = vperm.slane %v99, 0
  %v103 = vmul.f32 %v95, %v101
  %v104 = vmul.f32 %v96, %v101
  %v105 = vmul.f32 %v97, %v101
  %v106 = vmul.f32 %v98, %v101
  %v107 = vpack.c.bf16 %v104, %v103
  %v108 = vpack.c.bf16 %v106, %v105
  %v109 = vld [vmem:[%s2] sm:$0xf]
  %v110 = vld [vmem:[%s2 + $0x4] sm:$0xf]
  %v111 = vld [vmem:[%s2 + $0x8] sm:$0xf]
  %v112 = vld [vmem:[%s2 + $0xc] sm:$0xf]
  %v117 = vunpack.c.l.b16 %v109
  %v118 = vunpack.c.l.b16 %v110
  %v119 = vunpack.c.l.b16 %v111
  %v120 = vunpack.c.l.b16 %v112
  %v121 = vpack.c.b16 %v118, %v117
  %v122 = vpack.c.b16 %v120, %v119
  %v126 = vsel %vm27, %v107, 0
  %v129 = vsel %vm27, %v108, 0
  %131 = vmatpush.bf16.msra.mxu0 0
  %132 = vmatpush.bf16.msra.mxu0 0
  %133 = vmatpush.bf16.msra.mxu0 0
  %134 = vmatpush.bf16.msra.mxu0 0
  %135 = vmatpush.bf16.msra.mxu0 0
  %136 = vmatpush.bf16.msra.mxu0 0
  %137 = vmatpush.bf16.msra.mxu0 %v122
  %138 = vmatpush.bf16.msra.mxu0 %v121
  %139 = vmatmul.bf16.gmra.mxu0 %v126
  %v140 = vpop.f32.mrf.mxu0
  %v141 = vadd.f32 0.0, %v140
  %v142 = vpop.f32.mrf.mxu0
  %v143 = vadd.f32 0.0, %v142
  %144 = vmatmul.bf16.gmra.mxu0 %v129
  %v145 = vpop.f32.mrf.mxu0
  %v146 = vadd.f32 0.0, %v145
  %v147 = vpop.f32.mrf.mxu0
  %v148 = vadd.f32 0.0, %v147
  %149 = vdwg.mxu0
  %v150 = vpack.c.bf16 %v141, %v141
  %v151 = vpack.c.bf16 %v143, %v143
  %v152 = vpack.c.bf16 %v146, %v146
  %v153 = vpack.c.bf16 %v148, %v148
  %154 = vst [vmem:[%s3] sm:$0xf] %v150
  %155 = vst [vmem:[%s3 + $0x4] sm:$0xf] %v151
  %156 = vst [vmem:[%s3 + $0x8] sm:$0xf] %v152
  %157 = vst [vmem:[%s3 + $0xc] sm:$0xf] %v153
  // Predicated region
  $region14: #{mixer_model_forward.11} parent=0 // pred_check
    _
  $region15: #{mixer_model_forward.11} parent=0 // pred_check_branch
    %159 = sbr.rel (0) target = $region17
  $region16: #{mixer_model_forward.11} parent=0 // pred_region
    _
  $region17: #{mixer_model_forward.11} parent=0 // pred_fallthru
    _
  // Predicated region
  $region18: #{mixer_model_forward.11} parent=0 // pred_check
    _
  $region19: #{mixer_model_forward.11} parent=0 // pred_check_branch
    %161 = sbr.rel (0) target = $region21
  $region20: #{mixer_model_forward.11} parent=0 // pred_region
    _
  $region21: #{mixer_model_forward.11} parent=0 // pred_fallthru
    _

// kernel: mixer_model_forward.13
$region0: #{mixer_model_forward.13}
  #allocation0 [shape = 'u32[]', space=smem, size = 0x4, offset = 0x4, fixed_abs, tag = 'smem constant byte address 0x4 - core index']
  #allocation1 [shape = 'u32[72,128]{1,0:T(1,128)}', space=vmem, size = 0x9000, scoped, tag = 'internal scratch']
  #allocation2 [shape = 'f32[2,8,16]{2,1,0:T(8,128)}', space=vmem, size = 0x2000, scoped, tag = 'scratch operand']
  %s0 = inlined_call_operand.vmem [shape: bf16[2,16,64], index: 0, kind: input, shape index: {}]
  %s1 = inlined_call_operand.vmem [shape: bf16[2,16,2], index: 1, kind: input, shape index: {}]
  %s2 = inlined_call_operand.vmem [shape: bf16[2,16,32], index: 2, kind: input, shape index: {}]
  %s3 = inlined_call_operand.vmem [shape: f32[1,32], index: 3, kind: input, shape index: {}]
  %s4 = inlined_call_operand.vmem [shape: f32[1,32], index: 4, kind: input, shape index: {}]
  %s5 = inlined_call_operand.vmem [shape: bf16[2,16,32], index: 5, kind: output, shape index: {}]
  %s6 = sld [smem:[#allocation0]]
  $region57: #{mixer_model_forward.13} parent=0
    _
  %s8 = ssub.s32 1, %s6
  %s9 = scalar_select 0, %s8, %s6
  loop: start=0, step=1, limit=6
  $region2: #{mixer_model_forward.13} parent=0 // loop_pre_header
    _
  $region3: #{mixer_model_forward.13} parent=0 // loop_header
    %s11 = sphi 0, %s15
    %p12 = scmp.ge.s32.totalorder %s11, 6
    %s18 = sphi 0, %s30
    %s19 = sphi 0, %s26
    %s20 = sphi 0, %s18
    %s21 = sphi 0, %s19
    %s22 = sphi 0, %s20
    %s23 = sphi 0, %s21
    %s35 = sphi 0, %s37
    %s38 = sphi 0, %s35
    %s39 = sphi 0, %s38
    %s55 = sphi 0, %s39
    %s63 = sphi 0, %s65
    %s66 = sphi 0, %s63
    %s67 = sphi 0, %s66
    %s83 = sphi 0, %s67
    %s91 = sphi 0, %s93
    %s94 = sphi 0, %s91
    %s95 = sphi 0, %s94
    %s111 = sphi 0, %s95
    %s115 = sphi 0, %s115
    %s117 = sphi 0, %s115
    %s118 = sphi 0, %s117
    %s132 = sphi 0, %s118
    %s136 = sphi 0, %s136
    %s138 = sphi 0, %s136
    %s139 = sphi 0, %s138
    %s153 = sphi 0, %s139
    %s161 = sphi 0, %s163
    %s164 = sphi 0, %s161
    %s165 = sphi 0, %s164
    %s181 = sphi 0, %s165
  $region4: #{mixer_model_forward.13} parent=0 // loop_header_branch
    %14 = sbr.rel (%p12) target = $region8
  $region5: #{mixer_model_forward.13} parent=0 // loop_body
    %s16 = ssub.s32 %s11, 1
    %s17 = ssub.s32 %s11, 2
    %s24 = sadd.s32 1, %s19
    %p25 = scmp.ge.s32.totalorder %s24, 2
    %s26 = scalar_select %p25, 0, %s24
    %s27 = sadd.s32 1, %s18
    %s28 = scalar_select %p25, %s27, %s18
    %p29 = scmp.ge.s32.totalorder %s28, 2
    %s30 = scalar_select %p29, 0, %s28
    %s31 = ssub.s32 %s18, %s30
    %s32 = ssub.s32 %s19, %s26
    %s33 = sor.u32 %s31, %s32
    %p34 = scmp.eq.s32.totalorder %s33, 0
    %s36 = sadd.s32 %s35, 1
    %s37 = scalar_select %p34, %s35, %s36
    %p40 = pneg %p34
    %p41 = scmp.eq.s32.totalorder %s11, 3
    %p42 = por %p40, %p41
    %p43 = scmp.ne.s32.totalorder %s35, %s38
    %p44 = scmp.eq.s32.totalorder %s11, 0
    %p45 = por %p43, %p44
    %p46 = scmp.ne.s32.totalorder %s35, %s38
    %p47 = scmp.eq.s32.totalorder %s16, 3
    %p48 = por %p46, %p47
    %p49 = scmp.ne.s32.totalorder %s38, %s39
    %p50 = scmp.eq.s32.totalorder %s16, 0
    %p51 = por %p49, %p50
    %p52 = scmp.ne.s32.totalorder %s38, %s39
    %p53 = scmp.eq.s32.totalorder %s17, 3
    %p54 = por %p52, %p53
    %p56 = scmp.ne.s32.totalorder %s39, %s55
    %p57 = scmp.eq.s32.totalorder %s17, 0
    %p58 = por %p56, %p57
    %s59 = ssub.s32 %s18, %s30
    %s60 = ssub.s32 %s19, %s26
    %s61 = sor.u32 %s59, %s60
    %p62 = scmp.eq.s32.totalorder %s61, 0
    %s64 = sadd.s32 %s63, 1
    %s65 = scalar_select %p62, %s63, %s64
    %p68 = pneg %p62
    %p69 = scmp.eq.s32.totalorder %s11, 3
    %p70 = por %p68, %p69
    %p71 = scmp.ne.s32.totalorder %s63, %s66
    %p72 = scmp.eq.s32.totalorder %s11, 0
    %p73 = por %p71, %p72
    %p74 = scmp.ne.s32.totalorder %s63, %s66
    %p75 = scmp.eq.s32.totalorder %s16, 3
    %p76 = por %p74, %p75
    %p77 = scmp.ne.s32.totalorder %s66, %s67
    %p78 = scmp.eq.s32.totalorder %s16, 0
    %p79 = por %p77, %p78
    %p80 = scmp.ne.s32.totalorder %s66, %s67
    %p81 = scmp.eq.s32.totalorder %s17, 3
    %p82 = por %p80, %p81
    %p84 = scmp.ne.s32.totalorder %s67, %s83
    %p85 = scmp.eq.s32.totalorder %s17, 0
    %p86 = por %p84, %p85
    %s87 = ssub.s32 %s18, %s30
    %s88 = ssub.s32 %s19, %s26
    %s89 = sor.u32 %s87, %s88
    %p90 = scmp.eq.s32.totalorder %s89, 0
    %s92 = sadd.s32 %s91, 1
    %s93 = scalar_select %p90, %s91, %s92
    %p96 = pneg %p90
    %p97 = scmp.eq.s32.totalorder %s11, 3
    %p98 = por %p96, %p97
    %p99 = scmp.ne.s32.totalorder %s91, %s94
    %p100 = scmp.eq.s32.totalorder %s11, 0
    %p101 = por %p99, %p100
    %p102 = scmp.ne.s32.totalorder %s91, %s94
    %p103 = scmp.eq.s32.totalorder %s16, 3
    %p104 = por %p102, %p103
    %p105 = scmp.ne.s32.totalorder %s94, %s95
    %p106 = scmp.eq.s32.totalorder %s16, 0
    %p107 = por %p105, %p106
    %p108 = scmp.ne.s32.totalorder %s94, %s95
    %p109 = scmp.eq.s32.totalorder %s17, 3
    %p110 = por %p108, %p109
    %p112 = scmp.ne.s32.totalorder %s95, %s111
    %p113 = scmp.eq.s32.totalorder %s17, 0
    %p114 = por %p112, %p113
    %s116 = sadd.s32 %s115, 1
    %p119 = scmp.eq.s32.totalorder %s11, 3
    %p120 = scmp.ne.s32.totalorder %s115, %s117
    %p121 = scmp.eq.s32.totalorder %s11, 0
    %p122 = por %p120, %p121
    %p123 = scmp.ne.s32.totalorder %s115, %s117
    %p124 = scmp.eq.s32.totalorder %s16, 3
    %p125 = por %p123, %p124
    %p126 = scmp.ne.s32.totalorder %s117, %s118
    %p127 = scmp.eq.s32.totalorder %s16, 0
    %p128 = por %p126, %p127
    %p129 = scmp.ne.s32.totalorder %s117, %s118
    %p130 = scmp.eq.s32.totalorder %s17, 3
    %p131 = por %p129, %p130
    %p133 = scmp.ne.s32.totalorder %s118, %s132
    %p134 = scmp.eq.s32.totalorder %s17, 0
    %p135 = por %p133, %p134
    %s137 = sadd.s32 %s136, 1
    %p140 = scmp.eq.s32.totalorder %s11, 3
    %p141 = scmp.ne.s32.totalorder %s136, %s138
    %p142 = scmp.eq.s32.totalorder %s11, 0
    %p143 = por %p141, %p142
    %p144 = scmp.ne.s32.totalorder %s136, %s138
    %p145 = scmp.eq.s32.totalorder %s16, 3
    %p146 = por %p144, %p145
    %p147 = scmp.ne.s32.totalorder %s138, %s139
    %p148 = scmp.eq.s32.totalorder %s16, 0
    %p149 = por %p147, %p148
    %p150 = scmp.ne.s32.totalorder %s138, %s139
    %p151 = scmp.eq.s32.totalorder %s17, 3
    %p152 = por %p150, %p151
    %p154 = scmp.ne.s32.totalorder %s139, %s153
    %p155 = scmp.eq.s32.totalorder %s17, 0
    %p156 = por %p154, %p155
    %s157 = ssub.s32 %s18, %s30
    %s158 = ssub.s32 %s19, %s26
    %s159 = sor.u32 %s157, %s158
    %p160 = scmp.eq.s32.totalorder %s159, 0
    %s162 = sadd.s32 %s161, 1
    %s163 = scalar_select %p160, %s161, %s162
    %p166 = pneg %p160
    %p167 = scmp.eq.s32.totalorder %s11, 3
    %p168 = por %p166, %p167
    %p169 = scmp.ne.s32.totalorder %s161, %s164
    %p170 = scmp.eq.s32.totalorder %s11, 0
    %p171 = por %p169, %p170
    %p172 = scmp.ne.s32.totalorder %s161, %s164
    %p173 = scmp.eq.s32.totalorder %s16, 3
    %p174 = por %p172, %p173
    %p175 = scmp.ne.s32.totalorder %s164, %s165
    %p176 = scmp.eq.s32.totalorder %s16, 0
    %p177 = por %p175, %p176
    %p178 = scmp.ne.s32.totalorder %s164, %s165
    %p179 = scmp.eq.s32.totalorder %s17, 3
    %p180 = por %p178, %p179
    %p182 = scmp.ne.s32.totalorder %s165, %s181
    %p183 = scmp.eq.s32.totalorder %s17, 0
    %p184 = por %p182, %p183
    %p185 = scmp.le.s32.totalorder 1, %s11
    %p186 = scmp.lt.s32.totalorder %s11, 5
    %p187 = pnand %p185, %p186
    %p188 = pneg %p187
    // Predicated region
    $region9: #{mixer_model_forward.13} parent=5 // pred_check
      _
    $region10: #{mixer_model_forward.13} parent=5 // pred_check_branch
      %190 = sbr.rel (%p187) target = $region12
    $region11: #{mixer_model_forward.13} parent=5 // pred_region
      %s191 = ssub.s32 %s11, 1
      // Predicated region
      $region13: #{mixer_model_forward.13} parent=11 // pred_check
        %p192 = pneg %p128
      $region14: #{mixer_model_forward.13} parent=11 // pred_check_branch
        %194 = sbr.rel (%p192) target = $region16
      $region15: #{mixer_model_forward.13} parent=11 // pred_region
        _
      $region16: #{mixer_model_forward.13} parent=11 // pred_fallthru
        _
      // Predicated region
      $region17: #{mixer_model_forward.13} parent=11 // pred_check
        %p195 = pneg %p149
      $region18: #{mixer_model_forward.13} parent=11 // pred_check_branch
        %197 = sbr.rel (%p195) target = $region20
      $region19: #{mixer_model_forward.13} parent=11 // pred_region
        _
      $region20: #{mixer_model_forward.13} parent=11 // pred_fallthru
        _
    $region12: #{mixer_model_forward.13} parent=5 // pred_fallthru
      _
    %p198 = scmp.lt.s32.totalorder %s11, 4
    // Predicated region
    $region21: #{mixer_model_forward.13} parent=5 // pred_check
      %p199 = pneg %p198
    $region22: #{mixer_model_forward.13} parent=5 // pred_check_branch
      %201 = sbr.rel (%p199) target = $region24
    $region23: #{mixer_model_forward.13} parent=5 // pred_region
      // Predicated region
      $region25: #{mixer_model_forward.13} parent=23 // pred_check
        %p202 = pneg %p45
      $region26: #{mixer_model_forward.13} parent=23 // pred_check_branch
        %204 = sbr.rel (%p202) target = $region28
      $region27: #{mixer_model_forward.13} parent=23 // pred_region
        %p205 = scmp.lt.s32.totalorder %s18, 1
        %s206 = scalar_select %p205, %s18, 1
        %p207 = scmp.lt.s32.totalorder %s19, 1
        %s208 = scalar_select %p207, %s19, 1
        %s209 = smul.addr %s206, 2
        %s210 = sadd.s32 %s208, %s209
        %s211 = smul.addr %s210, 4
        %s212 = scalar_lea.vmem %s0, %s211
      $region28: #{mixer_model_forward.13} parent=23 // pred_fallthru
        _
      // Predicated region
      $region29: #{mixer_model_forward.13} parent=23 // pred_check
        %p213 = pneg %p73
      $region30: #{mixer_model_forward.13} parent=23 // pred_check_branch
        %215 = sbr.rel (%p213) target = $region32
      $region31: #{mixer_model_forward.13} parent=23 // pred_region
        %p216 = scmp.lt.s32.totalorder %s18, 1
        %s217 = scalar_select %p216, %s18, 1
        %p218 = scmp.lt.s32.totalorder %s19, 1
        %s219 = scalar_select %p218, %s19, 1
        %s220 = smul.addr %s217, 2
        %s221 = sadd.s32 %s219, %s220
        %s222 = smul.addr %s221, 4
        %s223 = scalar_lea.vmem %s1, %s222
      $region32: #{mixer_model_forward.13} parent=23 // pred_fallthru
        _
      // Predicated region
      $region33: #{mixer_model_forward.13} parent=23 // pred_check
        %p224 = pneg %p101
      $region34: #{mixer_model_forward.13} parent=23 // pred_check_branch
        %226 = sbr.rel (%p224) target = $region36
      $region35: #{mixer_model_forward.13} parent=23 // pred_region
        %p227 = scmp.lt.s32.totalorder %s18, 1
        %s228 = scalar_select %p227, %s18, 1
        %p229 = scmp.lt.s32.totalorder %s19, 1
        %s230 = scalar_select %p229, %s19, 1
        %s231 = smul.addr %s228, 2
        %s232 = sadd.s32 %s230, %s231
        %s233 = smul.addr %s232, 4
        %s234 = scalar_lea.vmem %s2, %s233
      $region36: #{mixer_model_forward.13} parent=23 // pred_fallthru
        _
    $region24: #{mixer_model_forward.13} parent=5 // pred_fallthru
      _
    %p235 = scmp.le.s32.totalorder 1, %s11
    %p236 = scmp.lt.s32.totalorder %s11, 5
    %p237 = pnand %p235, %p236
    %p238 = pneg %p237
    // Predicated region
    $region37: #{mixer_model_forward.13} parent=5 // pred_check
      _
    $region38: #{mixer_model_forward.13} parent=5 // pred_check_branch
      %240 = sbr.rel (%p237) target = $region40
    $region39: #{mixer_model_forward.13} parent=5 // pred_region
      %s241 = ssub.s32 %s11, 1
      %p242 = scmp.lt.s32.totalorder %s20, 1
      %s243 = scalar_select %p242, %s20, 1
      %p244 = scmp.lt.s32.totalorder %s21, 1
      %s245 = scalar_select %p244, %s21, 1
      %s246 = smul.addr %s243, 2
      %s247 = sadd.s32 %s245, %s246
      %s248 = smul.addr %s247, 4
      %s249 = scalar_lea.vmem %s0, %s248
      %p250 = pneg %p51
      %p251 = pneg %p48
      %p252 = scmp.lt.s32.totalorder %s20, 1
      %s253 = scalar_select %p252, %s20, 1
      %p254 = scmp.lt.s32.totalorder %s21, 1
      %s255 = scalar_select %p254, %s21, 1
      %s256 = smul.addr %s253, 2
      %s257 = sadd.s32 %s255, %s256
      %s258 = smul.addr %s257, 4
      %s259 = scalar_lea.vmem %s1, %s258
      %p260 = pneg %p79
      %p261 = pneg %p76
      %p262 = scmp.lt.s32.totalorder %s20, 1
      %s263 = scalar_select %p262, %s20, 1
      %p264 = scmp.lt.s32.totalorder %s21, 1
      %s265 = scalar_select %p264, %s21, 1
      %s266 = smul.addr %s263, 2
      %s267 = sadd.s32 %s265, %s266
      %s268 = smul.addr %s267, 4
      %s269 = scalar_lea.vmem %s2, %s268
      %p270 = pneg %p107
      %p271 = pneg %p104
      %p272 = pneg %p128
      %p273 = pneg %p125
      %p274 = pneg %p149
      %p275 = pneg %p146
      %p276 = pneg %p177
      %p277 = pneg %p174
      %p278 = scmp.lt.s32.totalorder %s20, 1
      %s279 = scalar_select %p278, %s20, 1
      %p280 = scmp.lt.s32.totalorder %s21, 1
      %s281 = scalar_select %p280, %s21, 1
      %s282 = smul.addr %s279, 2
      %s283 = sadd.s32 %s281, %s282
      %s284 = smul.addr %s283, 4
      %s285 = scalar_lea.vmem %s5, %s284
      %p286 = scmp.lt.s32.totalorder %s20, 1
      %s287 = scalar_select %p286, %s20, 1
      %p288 = scmp.lt.s32.totalorder %s21, 1
      %s289 = scalar_select %p288, %s21, 1
      %s290 = smul.addr %s287, 2
      %s291 = sadd.s32 %s289, %s290
      %s292 = smul.addr %s291, 4
      %s293 = scalar_lea.vmem %s0, %s292
      %p294 = scmp.lt.s32.totalorder %s20, 1
      %s295 = scalar_select %p294, %s20, 1
      %p296 = scmp.lt.s32.totalorder %s21, 1
      %s297 = scalar_select %p296, %s21, 1
      %s298 = smul.addr %s295, 2
      %s299 = sadd.s32 %s297, %s298
      %s300 = smul.addr %s299, 4
      %s301 = scalar_lea.vmem %s1, %s300
      %p302 = scmp.lt.s32.totalorder %s20, 1
      %s303 = scalar_select %p302, %s20, 1
      %p304 = scmp.lt.s32.totalorder %s21, 1
      %s305 = scalar_select %p304, %s21, 1
      %s306 = smul.addr %s303, 2
      %s307 = sadd.s32 %s305, %s306
      %s308 = smul.addr %s307, 4
      %s309 = scalar_lea.vmem %s2, %s308
      %p310 = scmp.lt.s32.totalorder %s20, 1
      %s311 = scalar_select %p310, %s20, 1
      %p312 = scmp.lt.s32.totalorder %s21, 1
      %s313 = scalar_select %p312, %s21, 1
      %s314 = smul.addr %s311, 2
      %s315 = sadd.s32 %s313, %s314
      %s316 = smul.addr %s315, 4
      %s317 = scalar_lea.vmem %s5, %s316
      %p318 = scmp.eq.s32.totalorder %s21, 0
      // Predicated region
      $region41: #{mixer_model_forward.13} parent=39 // pred_check
        %p319 = pneg %p318
      $region42: #{mixer_model_forward.13} parent=39 // pred_check_branch
        %321 = sbr.rel (%p319) target = $region44
      $region43: #{mixer_model_forward.13} parent=39 // pred_region
        %vm322 = vcmask 130048
        %323 = vst.msk [vmem:[#allocation2] sm:$0xff] %vm322, 0.0
        %324 = vst.msk [vmem:[#allocation2 + $0x8] sm:$0xff] %vm322, 0.0
      $region44: #{mixer_model_forward.13} parent=39 // pred_fallthru
        _
      %v325 = vld [vmem:[%s293] sm:$0xf]
      %v326 = vunpack.c.l.bf16 %v325
      %v327 = vld [vmem:[%s301] sm:$0xf]
      %v328 = vunpack.c.l.bf16 %v327
      %v329 = vmax.f32 %v328, 0.0
      %v330 = vand.u32 2147483647, %v328
      %v331 = vsub.f32 0.0, %v330
      %v332 = vmul.f32 %v331, 1.442695
      %v333 = vpow.pop %v332
      %v334 = vadd.f32 %v333, 1.0
      %v335 = vlog2.pop %v334
      %v336 = vmul.f32 %v335, 0.6931472
      %v337 = vadd.f32 %v329, %v336
      %v338 = vsub.f32 0.0, %v337
      %v339 = vlaneseq
      %v340 = vshrl.u32 %v339, 7
      %v341 = vlaneseq
      %v342 = vand.u32 %v341, 127
      %vm343 = vcmp.ge.s32.totalorder %v340, %v342
      %v344 = vsel %vm343, 1, 0
      %v345 = vcvt.s32.f32 %v344
      %vm346 = vcmask 64512
      %v348 = vsel %vm346, %v345, 0
      %350 = vmatpush.msra.mxu0 0.0
      %351 = vmatpush.msra.mxu0 0.0
      %352 = vmatpush.msra.mxu0 0.0
      %353 = vmatpush.msra.mxu0 0.0
      %354 = vmatpush.msra.mxu0 0.0
      %355 = vmatpush.msra.mxu0 0.0
      %356 = vmatpush.msra.mxu0 0.0
      %357 = vmatpush.msra.mxu0 0.0
      %358 = vmatpush.msra.mxu0 0.0
      %359 = vmatpush.msra.mxu0 0.0
      %360 = vmatpush.msra.mxu0 0.0
      %361 = vmatpush.msra.mxu0 0.0
      %362 = vmatpush.msra.mxu0 0.0
      %363 = vmatpush.msra.mxu0 0.0
      %364 = vmatpush.msra.mxu0 0.0
      %365 = vmatpush.msra.mxu0 %v338
      %366 = vmatmul.f32.gmra.mxu0 %v348
      %v367 = vpop.f32.mrf.mxu0
      %v368 = vadd.f32 0.0, %v367
      %369 = vdwg.mxu0
      %370 = vxpose.xlu0.b32.start [1/16] %v338, 128
      %371 = vxpose.xlu0.b32.cont [2/16] 0.0, 128
      %372 = vxpose.xlu0.b32.cont [3/16] 0.0, 128
      %373 = vxpose.xlu0.b32.cont [4/16] 0.0, 128
      %374 = vxpose.xlu0.b32.cont [5/16] 0.0, 128
      %375 = vxpose.xlu0.b32.cont [6/16] 0.0, 128
      %376 = vxpose.xlu0.b32.cont [7/16] 0.0, 128
      %377 = vxpose.xlu0.b32.cont [8/16] 0.0, 128
      %378 = vxpose.xlu0.b32.cont [9/16] 0.0, 128
      %379 = vxpose.xlu0.b32.cont [10/16] 0.0, 128
      %380 = vxpose.xlu0.b32.cont [11/16] 0.0, 128
      %381 = vxpose.xlu0.b32.cont [12/16] 0.0, 128
      %382 = vxpose.xlu0.b32.cont [13/16] 0.0, 128
      %383 = vxpose.xlu0.b32.cont [14/16] 0.0, 128
      %384 = vxpose.xlu0.b32.cont [15/16] 0.0, 128
      %385 = vxpose.xlu0.b32.end [16/16] 0.0, 128
      %v386 = vpop.trf.xlu0
      %v387 = vpop.trf.xlu0
      %v388 = vpop.trf.xlu0
      %v389 = vpop.trf.xlu0
      %v390 = vpop.trf.xlu0
      %v391 = vpop.trf.xlu0
      %v392 = vpop.trf.xlu0
      %v393 = vpop.trf.xlu0
      %v394 = vpop.trf.xlu0
      %v395 = vpop.trf.xlu0
      %v396 = vpop.trf.xlu0
      %v397 = vpop.trf.xlu0
      %v398 = vpop.trf.xlu0
      %v399 = vpop.trf.xlu0
      %v400 = vpop.trf.xlu0
      %v401 = vpop.trf.xlu0
      %v403 = vsel %vm346, %v386, 0
      %405 = vmatpush.xpose.msra.mxu0 0.0
      %406 = vmatpush.xpose.msra.mxu0 0.0
      %407 = vmatpush.xpose.msra.mxu0 0.0
      %408 = vmatpush.xpose.msra.mxu0 0.0
      %409 = vmatpush.xpose.msra.mxu0 0.0
      %410 = vmatpush.xpose.msra.mxu0 0.0
      %411 = vmatpush.xpose.msra.mxu0 0.0
      %412 = vmatpush.xpose.msra.mxu0 0.0
      %413 = vmatpush.xpose.msra.mxu0 0.0
      %414 = vmatpush.xpose.msra.mxu0 0.0
      %415 = vmatpush.xpose.msra.mxu0 0.0
      %416 = vmatpush.xpose.msra.mxu0 0.0
      %417 = vmatpush.xpose.msra.mxu0 0.0
      %418 = vmatpush.xpose.msra.mxu0 0.0
      %419 = vmatpush.xpose.msra.mxu0 0.0
      %420 = vmatpush.xpose.msra.mxu0 %v348
      %421 = vmatmul.f32.gmra.mxu0 %v403
      %v422 = vpop.f32.mrf.mxu0
      %v423 = vadd.f32 0.0, %v422
      %424 = vdwg.mxu0
      %v425 = vmul.f32 %v368, 1.442695
      %v426 = vpow.pop %v425
      %428 = vset.pattern.permute.xlu0 0
      %429 = vperm.xlu0 %428, %v368
      %v430 = vpop.permute.xlu0 %429
      %v432 = vperm.slane %v423, 0
      %v433 = vsub.f32 %v430, %v432
      %v434 = vsel %vm343, %v433, 0.0
      %v435 = vmul.f32 %v434, 1.442695
      %v436 = vpow.pop %v435
      %v437 = vsel %vm343, %v436, 0.0
      %439 = vrot.lane.b32.xlu0 %v326, 80
      %v440 = vpop.permute.xlu0 %439
      %441 = vrot.lane.b32.xlu0 %v326, 96
      %v442 = vpop.permute.xlu0 %441
      %v443 = vsel %vm346, %v440, 0
      %v445 = vsel %vm346, %v442, 0
      %447 = vmatpush.xpose.msra.mxu0 0.0
      %448 = vmatpush.xpose.msra.mxu0 0.0
      %449 = vmatpush.xpose.msra.mxu0 0.0
      %450 = vmatpush.xpose.msra.mxu0 0.0
      %451 = vmatpush.xpose.msra.mxu0 0.0
      %452 = vmatpush.xpose.msra.mxu0 0.0
      %453 = vmatpush.xpose.msra.mxu0 0.0
      %454 = vmatpush.xpose.msra.mxu0 0.0
      %455 = vmatpush.xpose.msra.mxu0 0.0
      %456 = vmatpush.xpose.msra.mxu0 0.0
      %457 = vmatpush.xpose.msra.mxu0 0.0
      %458 = vmatpush.xpose.msra.mxu0 0.0
      %459 = vmatpush.xpose.msra.mxu0 0.0
      %460 = vmatpush.xpose.msra.mxu0 0.0
      %461 = vmatpush.xpose.msra.mxu0 0.0
      %462 = vmatpush.xpose.msra.mxu0 %v445
      %463 = vmatmul.f32.gmra.mxu0 %v443
      %v464 = vpop.f32.mrf.mxu0
      %v465 = vadd.f32 0.0, %v464
      %466 = vdwg.mxu0
      %v467 = vmul.f32 %v437, %v465
      %v468 = vld [vmem:[#allocation2] sm:$0xff]
      %469 = vmatpush.msra.mxu0 0.0
      %470 = vmatpush.msra.mxu0 0.0
      %471 = vmatpush.msra.mxu0 0.0
      %472 = vmatpush.msra.mxu0 0.0
      %473 = vmatpush.msra.mxu0 0.0
      %474 = vmatpush.msra.mxu0 0.0
      %475 = vmatpush.msra.mxu0 0.0
      %476 = vmatpush.msra.mxu0 0.0
      %477 = vmatpush.msra.mxu0 0.0
      %478 = vmatpush.msra.mxu0 0.0
      %479 = vmatpush.msra.mxu0 0.0
      %480 = vmatpush.msra.mxu0 0.0
      %481 = vmatpush.msra.mxu0 0.0
      %482 = vmatpush.msra.mxu0 0.0
      %483 = vmatpush.msra.mxu0 0.0
      %484 = vmatpush.msra.mxu0 %v468
      %485 = vmatmul.f32.gmra.mxu0 %v443
      %v486 = vpop.f32.mrf.mxu0
      %v487 = vadd.f32 0.0, %v486
      %488 = vdwg.mxu0
      %490 = vset.pattern.permute.xlu0 0
      %491 = vperm.xlu0 %490, %v426
      %v492 = vpop.permute.xlu0 %491
      %v494 = vmul.f32 %v492, %v487
      %v496 = vsel %vm346, %v467, 0
      %498 = vmatpush.msra.mxu0 0.0
      %499 = vmatpush.msra.mxu0 0.0
      %500 = vmatpush.msra.mxu0 0.0
      %501 = vmatpush.msra.mxu0 0.0
      %502 = vmatpush.msra.mxu0 0.0
      %503 = vmatpush.msra.mxu0 0.0
      %504 = vmatpush.msra.mxu0 0.0
      %505 = vmatpush.msra.mxu0 0.0
      %506 = vmatpush.msra.mxu0 0.0
      %507 = vmatpush.msra.mxu0 0.0
      %508 = vmatpush.msra.mxu0 0.0
      %509 = vmatpush.msra.mxu0 0.0
      %510 = vmatpush.msra.mxu0 0.0
      %511 = vmatpush.msra.mxu0 0.0
      %512 = vmatpush.msra.mxu0 0.0
      %513 = vmatpush.msra.mxu0 %v326
      %514 = vmatmul.f32.gmra.mxu0 %v496
      %v515 = vpop.f32.mrf.mxu0
      %v516 = vadd.f32 %v494, %v515
      %517 = vdwg.mxu0
      %v518 = vperm.slane %v368, 7
      %v519 = vsub.f32 %v518, %v368
      %v520 = vmul.f32 %v519, 1.442695
      %v521 = vpow.pop %v520
      %v522 = vrot.slane %v426, 7
      %s523 = vtos %v522
      %v524 = vstv %s523
      %v526 = vmul.f32 %v524, %v468
      %528 = vset.pattern.permute.xlu0 0
      %529 = vperm.xlu0 %528, %v521
      %v530 = vpop.permute.xlu0 %529
      %v532 = vmul.f32 %v326, %v530
      %534 = vrot.lane.b32.xlu0 %v532, 96
      %v535 = vpop.permute.xlu0 %534
      %537 = vxpose.xlu0.b32.start [1/16] %v535, 128
      %538 = vxpose.xlu0.b32.cont [2/16] 0.0, 128
      %539 = vxpose.xlu0.b32.cont [3/16] 0.0, 128
      %540 = vxpose.xlu0.b32.cont [4/16] 0.0, 128
      %541 = vxpose.xlu0.b32.cont [5/16] 0.0, 128
      %542 = vxpose.xlu0.b32.cont [6/16] 0.0, 128
      %543 = vxpose.xlu0.b32.cont [7/16] 0.0, 128
      %544 = vxpose.xlu0.b32.cont [8/16] 0.0, 128
      %545 = vxpose.xlu0.b32.cont [9/16] 0.0, 128
      %546 = vxpose.xlu0.b32.cont [10/16] 0.0, 128
      %547 = vxpose.xlu0.b32.cont [11/16] 0.0, 128
      %548 = vxpose.xlu0.b32.cont [12/16] 0.0, 128
      %549 = vxpose.xlu0.b32.cont [13/16] 0.0, 128
      %550 = vxpose.xlu0.b32.cont [14/16] 0.0, 128
      %551 = vxpose.xlu0.b32.cont [15/16] 0.0, 128
      %552 = vxpose.xlu0.b32.end [16/16] 0.0, 128
      %v553 = vpop.trf.xlu0
      %v554 = vpop.trf.xlu0
      %v555 = vpop.trf.xlu0
      %v556 = vpop.trf.xlu0
      %v557 = vpop.trf.xlu0
      %v558 = vpop.trf.xlu0
      %v559 = vpop.trf.xlu0
      %v560 = vpop.trf.xlu0
      %v561 = vpop.trf.xlu0
      %v562 = vpop.trf.xlu0
      %v563 = vpop.trf.xlu0
      %v564 = vpop.trf.xlu0
      %v565 = vpop.trf.xlu0
      %v566 = vpop.trf.xlu0
      %v567 = vpop.trf.xlu0
      %v568 = vpop.trf.xlu0
      %v570 = vsel %vm346, %v553, 0
      %572 = vmatpush.msra.mxu0 0.0
      %573 = vmatpush.msra.mxu0 0.0
      %574 = vmatpush.msra.mxu0 0.0
      %575 = vmatpush.msra.mxu0 0.0
      %576 = vmatpush.msra.mxu0 0.0
      %577 = vmatpush.msra.mxu0 0.0
      %578 = vmatpush.msra.mxu0 0.0
      %579 = vmatpush.msra.mxu0 0.0
      %580 = vmatpush.msra.mxu0 0.0
      %581 = vmatpush.msra.mxu0 0.0
      %582 = vmatpush.msra.mxu0 0.0
      %583 = vmatpush.msra.mxu0 0.0
      %584 = vmatpush.msra.mxu0 0.0
      %585 = vmatpush.msra.mxu0 0.0
      %586 = vmatpush.msra.mxu0 0.0
      %587 = vmatpush.msra.mxu0 %v326
      %588 = vmatmul.f32.gmra.mxu0 %v570
      %v589 = vpop.f32.mrf.mxu0
      %v590 = vadd.f32 0.0, %v589
      %591 = vdwg.mxu0
      %v592 = vadd.f32 %v526, %v590
      %vm593 = vcmask 130048
      %594 = vst.msk [vmem:[#allocation2] sm:$0xff] %vm593, %v592
      %595 = vset.pattern.permute.xlu0 1
      %596 = vperm.xlu0 %595, %v368
      %v597 = vpop.permute.xlu0 %596
      %v599 = vperm.slane %v423, 1
      %v600 = vsub.f32 %v597, %v599
      %v601 = vsel %vm343, %v600, 0.0
      %v602 = vmul.f32 %v601, 1.442695
      %v603 = vpow.pop %v602
      %v604 = vsel %vm343, %v603, 0.0
      %605 = vrot.lane.b32.xlu0 %v326, 72
      %v606 = vpop.permute.xlu0 %605
      %607 = vrot.lane.b32.xlu0 %v326, 88
      %v608 = vpop.permute.xlu0 %607
      %v609 = vsel %vm346, %v606, 0
      %v611 = vsel %vm346, %v608, 0
      %613 = vmatpush.xpose.msra.mxu0 0.0
      %614 = vmatpush.xpose.msra.mxu0 0.0
      %615 = vmatpush.xpose.msra.mxu0 0.0
      %616 = vmatpush.xpose.msra.mxu0 0.0
      %617 = vmatpush.xpose.msra.mxu0 0.0
      %618 = vmatpush.xpose.msra.mxu0 0.0
      %619 = vmatpush.xpose.msra.mxu0 0.0
      %620 = vmatpush.xpose.msra.mxu0 0.0
      %621 = vmatpush.xpose.msra.mxu0 0.0
      %622 = vmatpush.xpose.msra.mxu0 0.0
      %623 = vmatpush.xpose.msra.mxu0 0.0
      %624 = vmatpush.xpose.msra.mxu0 0.0
      %625 = vmatpush.xpose.msra.mxu0 0.0
      %626 = vmatpush.xpose.msra.mxu0 0.0
      %627 = vmatpush.xpose.msra.mxu0 0.0
      %628 = vmatpush.xpose.msra.mxu0 %v611
      %629 = vmatmul.f32.gmra.mxu0 %v609
      %v630 = vpop.f32.mrf.mxu0
      %v631 = vadd.f32 0.0, %v630
      %632 = vdwg.mxu0
      %v633 = vmul.f32 %v604, %v631
      %s634 = scalar_lea.vmem [#allocation2], 8
      %v635 = vld [vmem:[%s634] sm:$0xff]
      %636 = vmatpush.msra.mxu0 0.0
      %637 = vmatpush.msra.mxu0 0.0
      %638 = vmatpush.msra.mxu0 0.0
      %639 = vmatpush.msra.mxu0 0.0
      %640 = vmatpush.msra.mxu0 0.0
      %641 = vmatpush.msra.mxu0 0.0
      %642 = vmatpush.msra.mxu0 0.0
      %643 = vmatpush.msra.mxu0 0.0
      %644 = vmatpush.msra.mxu0 0.0
      %645 = vmatpush.msra.mxu0 0.0
      %646 = vmatpush.msra.mxu0 0.0
      %647 = vmatpush.msra.mxu0 0.0
      %648 = vmatpush.msra.mxu0 0.0
      %649 = vmatpush.msra.mxu0 0.0
      %650 = vmatpush.msra.mxu0 0.0
      %651 = vmatpush.msra.mxu0 %v635
      %652 = vmatmul.f32.gmra.mxu0 %v609
      %v653 = vpop.f32.mrf.mxu0
      %v654 = vadd.f32 0.0, %v653
      %655 = vdwg.mxu0
      %656 = vset.pattern.permute.xlu0 1
      %657 = vperm.xlu0 %656, %v426
      %v658 = vpop.permute.xlu0 %657
      %v660 = vmul.f32 %v658, %v654
      %661 = vrot.lane.b32.xlu0 %v326, 112
      %v662 = vpop.permute.xlu0 %661
      %v665 = vsel %vm346, %v633, 0
      %667 = vmatpush.msra.mxu0 0.0
      %668 = vmatpush.msra.mxu0 0.0
      %669 = vmatpush.msra.mxu0 0.0
      %670 = vmatpush.msra.mxu0 0.0
      %671 = vmatpush.msra.mxu0 0.0
      %672 = vmatpush.msra.mxu0 0.0
      %673 = vmatpush.msra.mxu0 0.0
      %674 = vmatpush.msra.mxu0 0.0
      %675 = vmatpush.msra.mxu0 0.0
      %676 = vmatpush.msra.mxu0 0.0
      %677 = vmatpush.msra.mxu0 0.0
      %678 = vmatpush.msra.mxu0 0.0
      %679 = vmatpush.msra.mxu0 0.0
      %680 = vmatpush.msra.mxu0 0.0
      %681 = vmatpush.msra.mxu0 0.0
      %682 = vmatpush.msra.mxu0 %v662
      %683 = vmatmul.f32.gmra.mxu0 %v665
      %v684 = vpop.f32.mrf.mxu0
      %v685 = vadd.f32 %v660, %v684
      %686 = vdwg.mxu0
      %687 = vrot.lane.b32.xlu0 %v522, 127
      %v688 = vpop.permute.xlu0 %687
      %s689 = vtos %v688
      %v690 = vstv %s689
      %v692 = vmul.f32 %v690, %v635
      %693 = vset.pattern.permute.xlu0 1
      %694 = vperm.xlu0 %693, %v521
      %v695 = vpop.permute.xlu0 %694
      %v697 = vmul.f32 %v326, %v695
      %699 = vrot.lane.b32.xlu0 %v697, 88
      %v700 = vpop.permute.xlu0 %699
      %702 = vxpose.xlu0.b32.start [1/16] %v700, 128
      %703 = vxpose.xlu0.b32.cont [2/16] 0.0, 128
      %704 = vxpose.xlu0.b32.cont [3/16] 0.0, 128
      %705 = vxpose.xlu0.b32.cont [4/16] 0.0, 128
      %706 = vxpose.xlu0.b32.cont [5/16] 0.0, 128
      %707 = vxpose.xlu0.b32.cont [6/16] 0.0, 128
      %708 = vxpose.xlu0.b32.cont [7/16] 0.0, 128
      %709 = vxpose.xlu0.b32.cont [8/16] 0.0, 128
      %710 = vxpose.xlu0.b32.cont [9/16] 0.0, 128
      %711 = vxpose.xlu0.b32.cont [10/16] 0.0, 128
      %712 = vxpose.xlu0.b32.cont [11/16] 0.0, 128
      %713 = vxpose.xlu0.b32.cont [12/16] 0.0, 128
      %714 = vxpose.xlu0.b32.cont [13/16] 0.0, 128
      %715 = vxpose.xlu0.b32.cont [14/16] 0.0, 128
      %716 = vxpose.xlu0.b32.cont [15/16] 0.0, 128
      %717 = vxpose.xlu0.b32.end [16/16] 0.0, 128
      %v718 = vpop.trf.xlu0
      %v719 = vpop.trf.xlu0
      %v720 = vpop.trf.xlu0
      %v721 = vpop.trf.xlu0
      %v722 = vpop.trf.xlu0
      %v723 = vpop.trf.xlu0
      %v724 = vpop.trf.xlu0
      %v725 = vpop.trf.xlu0
      %v726 = vpop.trf.xlu0
      %v727 = vpop.trf.xlu0
      %v728 = vpop.trf.xlu0
      %v729 = vpop.trf.xlu0
      %v730 = vpop.trf.xlu0
      %v731 = vpop.trf.xlu0
      %v732 = vpop.trf.xlu0
      %v733 = vpop.trf.xlu0
      %v735 = vsel %vm346, %v718, 0
      %737 = vmatpush.msra.mxu0 0.0
      %738 = vmatpush.msra.mxu0 0.0
      %739 = vmatpush.msra.mxu0 0.0
      %740 = vmatpush.msra.mxu0 0.0
      %741 = vmatpush.msra.mxu0 0.0
      %742 = vmatpush.msra.mxu0 0.0
      %743 = vmatpush.msra.mxu0 0.0
      %744 = vmatpush.msra.mxu0 0.0
      %745 = vmatpush.msra.mxu0 0.0
      %746 = vmatpush.msra.mxu0 0.0
      %747 = vmatpush.msra.mxu0 0.0
      %748 = vmatpush.msra.mxu0 0.0
      %749 = vmatpush.msra.mxu0 0.0
      %750 = vmatpush.msra.mxu0 0.0
      %751 = vmatpush.msra.mxu0 0.0
      %752 = vmatpush.msra.mxu0 %v662
      %753 = vmatmul.f32.gmra.mxu0 %v735
      %v754 = vpop.f32.mrf.mxu0
      %v755 = vadd.f32 0.0, %v754
      %756 = vdwg.mxu0
      %v757 = vadd.f32 %v692, %v755
      %758 = vst.msk [vmem:[%s634] sm:$0xff] %vm593, %v757
      %760 = vrot.lane.b32.xlu0 %v685, 16
      %v761 = vpop.permute.xlu0 %760
      %v763 = vsel %vm593, %v516, %v761
      %v764 = vld [vmem:[%s3] sm:$0x1]
      %v766 = vperm.slane %v764, 0
      %v768 = vmul.f32 %v766, %v326
      %v769 = vadd.f32 %v763, %v768
      %v770 = vld [vmem:[%s309] sm:$0xf]
      %v771 = vunpack.c.l.bf16 %v770
      %v772 = vld [vmem:[%s4] sm:$0x1]
      %v774 = vperm.slane %v772, 0
      %v776 = vadd.f32 %v771, %v774
      %v777 = vxor.u32 %v776, 2147483648
      %v778 = vmul.f32 %v777, 1.442695
      %v779 = vpow.pop %v778
      %v780 = vadd.f32 %v779, 1.0
      %v781 = vrcp.pop %v780
      %v782 = vmul.f32 %v780, %v781
      %v783 = vsub.f32 1.0, %v782
      %v784 = vmul.f32 %v781, %v783
      %v785 = vadd.f32 %v781, %v784
      %vm786 = vweird.f32 %v780
      %vm787 = vweird.f32 %v781
      %vm788 = vmor %vm786, %vm787
      %v789 = vsel %vm788, %v781, %v785
      %v790 = vand.u32 2147483647, %v780
      %vm791 = vcmp.eq.f32.partialorder %v790, 8.507059e+37
      %v792 = vand.u32 %v780, 2147483648
      %v793 = vor.u32 1.1754944e-38, %v792
      %v794 = vsel %vm791, %v793, %v789
      %v795 = vmul.f32 1.0, %v794
      %v796 = vmul.f32 %v776, %v795
      %v797 = vmul.f32 %v769, %v796
      %v798 = vpack.c.bf16 %v797, %v797
      %vm799 = vcmask 257024
      %800 = vst.msk [vmem:[%s317] sm:$0xf] %vm799, %v798
      %p801 = scmp.lt.s32.totalorder %s20, 1
      %s802 = scalar_select %p801, %s20, 1
      %p803 = scmp.lt.s32.totalorder %s21, 1
      %s804 = scalar_select %p803, %s21, 1
      %s805 = smul.addr %s802, 2
      %s806 = sadd.s32 %s804, %s805
      %s807 = smul.addr %s806, 4
      %s808 = scalar_lea.vmem %s5, %s807
      // Predicated region
      $region45: #{mixer_model_forward.13} parent=39 // pred_check
        %p809 = pneg %p174
      $region46: #{mixer_model_forward.13} parent=39 // pred_check_branch
        %811 = sbr.rel (%p809) target = $region48
      $region47: #{mixer_model_forward.13} parent=39 // pred_region
        _
      $region48: #{mixer_model_forward.13} parent=39 // pred_fallthru
        _
    $region40: #{mixer_model_forward.13} parent=5 // pred_fallthru
      _
    %p812 = scmp.le.s32.totalorder 2, %s11
    // Predicated region
    $region49: #{mixer_model_forward.13} parent=5 // pred_check
      %p813 = pneg %p812
    $region50: #{mixer_model_forward.13} parent=5 // pred_check_branch
      %815 = sbr.rel (%p813) target = $region52
    $region51: #{mixer_model_forward.13} parent=5 // pred_region
      %s816 = ssub.s32 %s11, 2
      // Predicated region
      $region53: #{mixer_model_forward.13} parent=51 // pred_check
        %p817 = pneg %p180
      $region54: #{mixer_model_forward.13} parent=51 // pred_check_branch
        %819 = sbr.rel (%p817) target = $region56
      $region55: #{mixer_model_forward.13} parent=51 // pred_region
        %p820 = scmp.lt.s32.totalorder %s22, 1
        %s821 = scalar_select %p820, %s22, 1
        %p822 = scmp.lt.s32.totalorder %s23, 1
        %s823 = scalar_select %p822, %s23, 1
        %s824 = smul.addr %s821, 2
        %s825 = sadd.s32 %s823, %s824
        %s826 = smul.addr %s825, 4
        %s827 = scalar_lea.vmem %s5, %s826
      $region56: #{mixer_model_forward.13} parent=51 // pred_fallthru
        _
    $region52: #{mixer_model_forward.13} parent=5 // pred_fallthru
      _
  $region6: #{mixer_model_forward.13} parent=0 // loop_footer
    %s15 = sadd.s32 1, %s11
  $region7: #{mixer_model_forward.13} parent=0 // loop_footer_branch
    %10 = sbr.rel target = $region3
  $region8: #{mixer_model_forward.13} parent=0 // loop_exit
    _

// kernel: mixer_model_forward.21
$region0: #{mixer_model_forward.21}
  #allocation0 [shape = 'u32[]', space=smem, size = 0x4, offset = 0x4, fixed_abs, tag = 'smem constant byte address 0x4 - core index']
  #allocation1 [shape = 'u32[72,128]{1,0:T(1,128)}', space=vmem, size = 0x9000, scoped, tag = 'internal scratch']
  %s0 = inlined_call_operand.vmem [shape: bf16[32,32], index: 0, kind: input, shape index: {}]
  %s1 = inlined_call_operand.vmem [shape: f32[1,32], index: 1, kind: input, shape index: {}]
  %s2 = inlined_call_operand.hbm [shape: f32[32,32], index: 2, kind: output, shape index: {}]
  %s3 = sld [smem:[#allocation0]]
  $region18: #{mixer_model_forward.21} parent=0
    _
  %s5 = ssub.s32 1, %s3
  %s6 = scalar_select 0, %s5, %s3
  $region1: #{mixer_model_forward.21} parent=0
    #allocation2 [shape = 'u8[16384]{0}', space=vmem, size = 0x4000, scoped, tag = 'output window, operand 0, single buffered']
    #allocation3 [shape = 's32[1]{0}', space=sflag, size = 0x4, scoped, tag = 'scoped memory for mixer_model_forward.21']
    %7 = vsyncpa [#allocation3], 0
    // Predicated region
    $region2: #{mixer_model_forward.21} parent=1 // pred_check
      _
    $region3: #{mixer_model_forward.21} parent=1 // pred_check_branch
      %9 = sbr.rel (0) target = $region5
    $region4: #{mixer_model_forward.21} parent=1 // pred_region
      _
    $region5: #{mixer_model_forward.21} parent=1 // pred_fallthru
      _
    // Predicated region
    $region6: #{mixer_model_forward.21} parent=1 // pred_check
      _
    $region7: #{mixer_model_forward.21} parent=1 // pred_check_branch
      %11 = sbr.rel (0) target = $region9
    $region8: #{mixer_model_forward.21} parent=1 // pred_region
      _
    $region9: #{mixer_model_forward.21} parent=1 // pred_fallthru
      _
    %v12 = vld [vmem:[%s0] sm:$0xf]
    %v13 = vld [vmem:[%s0 + $0x4] sm:$0xf]
    %v14 = vld [vmem:[%s0 + $0x8] sm:$0xf]
    %v15 = vld [vmem:[%s0 + $0xc] sm:$0xf]
    %v16 = vunpack.c.l.bf16 %v12
    %v17 = vunpack.c.l.bf16 %v13
    %v18 = vunpack.c.l.bf16 %v14
    %v19 = vunpack.c.l.bf16 %v15
    %v20 = vmul.f32 %v16, %v16
    %v21 = vmul.f32 %v17, %v17
    %v22 = vmul.f32 %v18, %v18
    %v23 = vmul.f32 %v19, %v19
    %vm24 = vcmask 261120
    %v25 = vsel %vm24, %v20, 0.0
    %26 = vadd.xlane.f32.xlu0 %v25
    %v27 = vpop.xlane.xlu0 %26
    %v28 = vsel %vm24, %v21, 0.0
    %29 = vadd.xlane.f32.xlu0 %v28
    %v30 = vpop.xlane.xlu0 %29
    %v31 = vsel %vm24, %v22, 0.0
    %32 = vadd.xlane.f32.xlu0 %v31
    %v33 = vpop.xlane.xlu0 %32
    %v34 = vsel %vm24, %v23, 0.0
    %35 = vadd.xlane.f32.xlu0 %v34
    %v36 = vpop.xlane.xlu0 %35
    %v37 = vrcp.pop 32.0
    %v38 = vmul.f32 32.0, %v37
    %v39 = vsub.f32 1.0, %v38
    %v40 = vmul.f32 %v37, %v39
    %v41 = vadd.f32 %v37, %v40
    %vm42 = vweird.f32 %v37
    %v43 = vsel %vm42, %v37, %v41
    %v44 = vmul.f32 %v27, %v43
    %v45 = vmul.f32 %v30, %v43
    %v46 = vmul.f32 %v33, %v43
    %v47 = vmul.f32 %v36, %v43
    %v48 = vadd.f32 %v44, 1e-05
    %v49 = vadd.f32 %v45, 1e-05
    %v50 = vadd.f32 %v46, 1e-05
    %v51 = vadd.f32 %v47, 1e-05
    %v52 = vrsqrt.pop %v48
    %v53 = vmul.f32 %v52, %v48
    %v54 = vmul.f32 %v53, %v52
    %v55 = vmul.f32 0.5, %v54
    %v56 = vsub.f32 1.5, %v55
    %v57 = vmul.f32 %v52, %v56
    %vm58 = vweird.f32 %v48
    %vm59 = vweird.f32 %v52
    %vm60 = vmor %vm58, %vm59
    %v61 = vsel %vm60, %v52, %v57
    %v62 = vrsqrt.pop %v49
    %v63 = vmul.f32 %v62, %v49
    %v64 = vmul.f32 %v63, %v62
    %v65 = vmul.f32 0.5, %v64
    %v66 = vsub.f32 1.5, %v65
    %v67 = vmul.f32 %v62, %v66
    %vm68 = vweird.f32 %v49
    %vm69 = vweird.f32 %v62
    %vm70 = vmor %vm68, %vm69
    %v71 = vsel %vm70, %v62, %v67
    %v72 = vrsqrt.pop %v50
    %v73 = vmul.f32 %v72, %v50
    %v74 = vmul.f32 %v73, %v72
    %v75 = vmul.f32 0.5, %v74
    %v76 = vsub.f32 1.5, %v75
    %v77 = vmul.f32 %v72, %v76
    %vm78 = vweird.f32 %v50
    %vm79 = vweird.f32 %v72
    %vm80 = vmor %vm78, %vm79
    %v81 = vsel %vm80, %v72, %v77
    %v82 = vrsqrt.pop %v51
    %v83 = vmul.f32 %v82, %v51
    %v84 = vmul.f32 %v83, %v82
    %v85 = vmul.f32 0.5, %v84
    %v86 = vsub.f32 1.5, %v85
    %v87 = vmul.f32 %v82, %v86
    %vm88 = vweird.f32 %v51
    %vm89 = vweird.f32 %v82
    %vm90 = vmor %vm88, %vm89
    %v91 = vsel %vm90, %v82, %v87
    %v92 = vmul.f32 %v16, %v61
    %v93 = vmul.f32 %v17, %v71
    %v94 = vmul.f32 %v18, %v81
    %v95 = vmul.f32 %v19, %v91
    %v96 = vld [vmem:[%s1] sm:$0x1]
    %v98 = vperm.slane %v96, 0
    %v100 = vmul.f32 %v92, %v98
    %v101 = vmul.f32 %v93, %v98
    %v102 = vmul.f32 %v94, %v98
    %v103 = vmul.f32 %v95, %v98
    %104 = vst.msk [vmem:[#allocation2] sm:$0xff] %vm24, %v100
    %105 = vst.msk [vmem:[#allocation2 + $0x8] sm:$0xff] %vm24, %v101
    %106 = vst.msk [vmem:[#allocation2 + $0x10] sm:$0xff] %vm24, %v102
    %107 = vst.msk [vmem:[#allocation2 + $0x18] sm:$0xff] %vm24, %v103
    // Predicated region
    $region10: #{mixer_model_forward.21} parent=1 // pred_check
      _
    $region11: #{mixer_model_forward.21} parent=1 // pred_check_branch
      %109 = sbr.rel (0) target = $region13
    $region12: #{mixer_model_forward.21} parent=1 // pred_region
      %111 = vsyncadd [#allocation3], 0
      %s112 = sshll.u32 [#allocation2], 4
      %s113 = int_to_ptr.vmem [resolvable:$true] %s112
      %s114 = sshll.u32 %s2, 4
      %s115 = int_to_ptr.hbm [resolvable:$true] %s114
      %120 = dma.vmem_to_hbm [thread:$0]  %s113, 512, %s115, [#allocation3], 128, 128, 8
    $region13: #{mixer_model_forward.21} parent=1 // pred_fallthru
      _
    // Predicated region
    $region14: #{mixer_model_forward.21} parent=1 // pred_check
      _
    $region15: #{mixer_model_forward.21} parent=1 // pred_check_branch
      %122 = sbr.rel (0) target = $region17
    $region16: #{mixer_model_forward.21} parent=1 // pred_region
      %124 = dma.done [#allocation3], 512
    $region17: #{mixer_model_forward.21} parent=1 // pred_fallthru
      _
    %125 = vsyncpa [#allocation3], 1

// kernel: mixer_model_forward.15
$region0: #{mixer_model_forward.15}
  #allocation0 [shape = 'u32[]', space=smem, size = 0x4, offset = 0x4, fixed_abs, tag = 'smem constant byte address 0x4 - core index']
  #allocation1 [shape = 'u32[72,128]{1,0:T(1,128)}', space=vmem, size = 0x9000, scoped, tag = 'internal scratch']
  #allocation2 [shape = 'f32[32,32]{1,0:T(8,128)}', space=vmem, size = 0x4000, scoped, tag = 'scratch operand']
  %s0 = inlined_call_operand.vmem [shape: bf16[32,32], index: 0, kind: input, shape index: {}]
  %s1 = inlined_call_operand.vmem [shape: f32[1,32], index: 1, kind: input, shape index: {}]
  %s2 = inlined_call_operand.vmem [shape: bf16[32,64], index: 2, kind: input, shape index: {}]
  %s3 = inlined_call_operand.vmem [shape: bf16[32,64], index: 3, kind: input, shape index: {}]
  %s4 = inlined_call_operand.vmem [shape: bf16[64,32], index: 4, kind: input, shape index: {}]
  %s5 = inlined_call_operand.vmem [shape: bf16[32,32], index: 5, kind: output, shape index: {}]
  %s6 = sld [smem:[#allocation0]]
  $region38: #{mixer_model_forward.15} parent=0
    _
  %s8 = ssub.s32 1, %s6
  %s9 = scalar_select 0, %s8, %s6
  // Predicated region
  $region2: #{mixer_model_forward.15} parent=0 // pred_check
    _
  $region3: #{mixer_model_forward.15} parent=0 // pred_check_branch
    %11 = sbr.rel (0) target = $region5
  $region4: #{mixer_model_forward.15} parent=0 // pred_region
    _
  $region5: #{mixer_model_forward.15} parent=0 // pred_fallthru
    _
  // Predicated region
  $region6: #{mixer_model_forward.15} parent=0 // pred_check
    _
  $region7: #{mixer_model_forward.15} parent=0 // pred_check_branch
    %13 = sbr.rel (0) target = $region9
  $region8: #{mixer_model_forward.15} parent=0 // pred_region
    _
  $region9: #{mixer_model_forward.15} parent=0 // pred_fallthru
    _
  // Predicated region
  $region10: #{mixer_model_forward.15} parent=0 // pred_check
    _
  $region11: #{mixer_model_forward.15} parent=0 // pred_check_branch
    %15 = sbr.rel (0) target = $region13
  $region12: #{mixer_model_forward.15} parent=0 // pred_region
    _
  $region13: #{mixer_model_forward.15} parent=0 // pred_fallthru
    _
  // Predicated region
  $region14: #{mixer_model_forward.15} parent=0 // pred_check
    _
  $region15: #{mixer_model_forward.15} parent=0 // pred_check_branch
    %17 = sbr.rel (0) target = $region17
  $region16: #{mixer_model_forward.15} parent=0 // pred_region
    _
  $region17: #{mixer_model_forward.15} parent=0 // pred_fallthru
    _
  // Predicated region
  $region18: #{mixer_model_forward.15} parent=0 // pred_check
    _
  $region19: #{mixer_model_forward.15} parent=0 // pred_check_branch
    %19 = sbr.rel (0) target = $region21
  $region20: #{mixer_model_forward.15} parent=0 // pred_region
    _
  $region21: #{mixer_model_forward.15} parent=0 // pred_fallthru
    _
  %p21 = scmp.eq.s32.totalorder 0, 0
  // Predicated region
  $region22: #{mixer_model_forward.15} parent=0 // pred_check
    %p22 = pneg %p21
  $region23: #{mixer_model_forward.15} parent=0 // pred_check_branch
    %24 = sbr.rel (%p22) target = $region25
  $region24: #{mixer_model_forward.15} parent=0 // pred_region
    %vm25 = vcmask 261120
    %26 = vst.msk [vmem:[#allocation2] sm:$0xff] %vm25, 0.0
    %27 = vst.msk [vmem:[#allocation2 + $0x8] sm:$0xff] %vm25, 0.0
    %28 = vst.msk [vmem:[#allocation2 + $0x10] sm:$0xff] %vm25, 0.0
    %29 = vst.msk [vmem:[#allocation2 + $0x18] sm:$0xff] %vm25, 0.0
  $region25: #{mixer_model_forward.15} parent=0 // pred_fallthru
    _
  %v30 = vld [vmem:[%s0] sm:$0xf]
  %v31 = vld [vmem:[%s0 + $0x4] sm:$0xf]
  %v32 = vld [vmem:[%s0 + $0x8] sm:$0xf]
  %v33 = vld [vmem:[%s0 + $0xc] sm:$0xf]
  %v34 = vunpack.c.l.bf16 %v30
  %v35 = vunpack.c.l.bf16 %v31
  %v36 = vunpack.c.l.bf16 %v32
  %v37 = vunpack.c.l.bf16 %v33
  %v38 = vmul.f32 %v34, %v34
  %v39 = vmul.f32 %v35, %v35
  %v40 = vmul.f32 %v36, %v36
  %v41 = vmul.f32 %v37, %v37
  %vm42 = vcmask 261120
  %v43 = vsel %vm42, %v38, 0.0
  %44 = vadd.xlane.f32.xlu0 %v43
  %v45 = vpop.xlane.xlu0 %44
  %v46 = vsel %vm42, %v39, 0.0
  %47 = vadd.xlane.f32.xlu0 %v46
  %v48 = vpop.xlane.xlu0 %47
  %v49 = vsel %vm42, %v40, 0.0
  %50 = vadd.xlane.f32.xlu0 %v49
  %v51 = vpop.xlane.xlu0 %50
  %v52 = vsel %vm42, %v41, 0.0
  %53 = vadd.xlane.f32.xlu0 %v52
  %v54 = vpop.xlane.xlu0 %53
  %v55 = vrcp.pop 32.0
  %v56 = vmul.f32 32.0, %v55
  %v57 = vsub.f32 1.0, %v56
  %v58 = vmul.f32 %v55, %v57
  %v59 = vadd.f32 %v55, %v58
  %vm60 = vweird.f32 %v55
  %v61 = vsel %vm60, %v55, %v59
  %v62 = vmul.f32 %v45, %v61
  %v63 = vmul.f32 %v48, %v61
  %v64 = vmul.f32 %v51, %v61
  %v65 = vmul.f32 %v54, %v61
  %v66 = vadd.f32 %v62, 1e-05
  %v67 = vadd.f32 %v63, 1e-05
  %v68 = vadd.f32 %v64, 1e-05
  %v69 = vadd.f32 %v65, 1e-05
  %v70 = vrsqrt.pop %v66
  %v71 = vmul.f32 %v70, %v66
  %v72 = vmul.f32 %v71, %v70
  %v73 = vmul.f32 0.5, %v72
  %v74 = vsub.f32 1.5, %v73
  %v75 = vmul.f32 %v70, %v74
  %vm76 = vweird.f32 %v66
  %vm77 = vweird.f32 %v70
  %vm78 = vmor %vm76, %vm77
  %v79 = vsel %vm78, %v70, %v75
  %v80 = vrsqrt.pop %v67
  %v81 = vmul.f32 %v80, %v67
  %v82 = vmul.f32 %v81, %v80
  %v83 = vmul.f32 0.5, %v82
  %v84 = vsub.f32 1.5, %v83
  %v85 = vmul.f32 %v80, %v84
  %vm86 = vweird.f32 %v67
  %vm87 = vweird.f32 %v80
  %vm88 = vmor %vm86, %vm87
  %v89 = vsel %vm88, %v80, %v85
  %v90 = vrsqrt.pop %v68
  %v91 = vmul.f32 %v90, %v68
  %v92 = vmul.f32 %v91, %v90
  %v93 = vmul.f32 0.5, %v92
  %v94 = vsub.f32 1.5, %v93
  %v95 = vmul.f32 %v90, %v94
  %vm96 = vweird.f32 %v68
  %vm97 = vweird.f32 %v90
  %vm98 = vmor %vm96, %vm97
  %v99 = vsel %vm98, %v90, %v95
  %v100 = vrsqrt.pop %v69
  %v101 = vmul.f32 %v100, %v69
  %v102 = vmul.f32 %v101, %v100
  %v103 = vmul.f32 0.5, %v102
  %v104 = vsub.f32 1.5, %v103
  %v105 = vmul.f32 %v100, %v104
  %vm106 = vweird.f32 %v69
  %vm107 = vweird.f32 %v100
  %vm108 = vmor %vm106, %vm107
  %v109 = vsel %vm108, %v100, %v105
  %v110 = vmul.f32 %v34, %v79
  %v111 = vmul.f32 %v35, %v89
  %v112 = vmul.f32 %v36, %v99
  %v113 = vmul.f32 %v37, %v109
  %v114 = vld [vmem:[%s1] sm:$0x1]
  %v116 = vperm.slane %v114, 0
  %v118 = vmul.f32 %v110, %v116
  %v119 = vmul.f32 %v111, %v116
  %v120 = vmul.f32 %v112, %v116
  %v121 = vmul.f32 %v113, %v116
  %v122 = vpack.c.bf16 %v119, %v118
  %v123 = vpack.c.bf16 %v121, %v120
  %v124 = vld [vmem:[%s2] sm:$0xf]
  %v125 = vld [vmem:[%s2 + $0x4] sm:$0xf]
  %v126 = vld [vmem:[%s2 + $0x8] sm:$0xf]
  %v127 = vld [vmem:[%s2 + $0xc] sm:$0xf]
  %v132 = vunpack.c.l.b16 %v124
  %v133 = vunpack.c.l.b16 %v125
  %v134 = vunpack.c.l.b16 %v126
  %v135 = vunpack.c.l.b16 %v127
  %v136 = vpack.c.b16 %v133, %v132
  %v137 = vpack.c.b16 %v135, %v134
  %v141 = vsel %vm42, %v122, 0
  %v144 = vsel %vm42, %v123, 0
  %146 = vmatpush.bf16.msra.mxu0 0
  %147 = vmatpush.bf16.msra.mxu0 0
  %148 = vmatpush.bf16.msra.mxu0 0
  %149 = vmatpush.bf16.msra.mxu0 0
  %150 = vmatpush.bf16.msra.mxu0 0
  %151 = vmatpush.bf16.msra.mxu0 0
  %152 = vmatpush.bf16.msra.mxu0 %v137
  %153 = vmatpush.bf16.msra.mxu0 %v136
  %154 = vmatmul.bf16.gmra.mxu0 %v141
  %v155 = vpop.f32.mrf.mxu0
  %v156 = vadd.f32 0.0, %v155
  %v157 = vpop.f32.mrf.mxu0
  %v158 = vadd.f32 0.0, %v157
  %159 = vmatmul.bf16.gmra.mxu0 %v144
  %v160 = vpop.f32.mrf.mxu0
  %v161 = vadd.f32 0.0, %v160
  %v162 = vpop.f32.mrf.mxu0
  %v163 = vadd.f32 0.0, %v162
  %164 = vdwg.mxu0
  %v165 = vld [vmem:[%s3] sm:$0xf]
  %v166 = vld [vmem:[%s3 + $0x4] sm:$0xf]
  %v167 = vld [vmem:[%s3 + $0x8] sm:$0xf]
  %v168 = vld [vmem:[%s3 + $0xc] sm:$0xf]
  %v173 = vunpack.c.l.b16 %v165
  %v174 = vunpack.c.l.b16 %v166
  %v175 = vunpack.c.l.b16 %v167
  %v176 = vunpack.c.l.b16 %v168
  %v177 = vpack.c.b16 %v174, %v173
  %v178 = vpack.c.b16 %v176, %v175
  %181 = vmatpush.bf16.msra.mxu0 0
  %182 = vmatpush.bf16.msra.mxu0 0
  %183 = vmatpush.bf16.msra.mxu0 0
  %184 = vmatpush.bf16.msra.mxu0 0
  %185 = vmatpush.bf16.msra.mxu0 0
  %186 = vmatpush.bf16.msra.mxu0 0
  %187 = vmatpush.bf16.msra.mxu0 %v178
  %188 = vmatpush.bf16.msra.mxu0 %v177
  %189 = vmatmul.bf16.gmra.mxu0 %v141
  %v190 = vpop.f32.mrf.mxu0
  %v191 = vadd.f32 0.0, %v190
  %v192 = vpop.f32.mrf.mxu0
  %v193 = vadd.f32 0.0, %v192
  %194 = vmatmul.bf16.gmra.mxu0 %v144
  %v195 = vpop.f32.mrf.mxu0
  %v196 = vadd.f32 0.0, %v195
  %v197 = vpop.f32.mrf.mxu0
  %v198 = vadd.f32 0.0, %v197
  %199 = vdwg.mxu0
  %v200 = vxor.u32 %v156, 2147483648
  %v201 = vxor.u32 %v158, 2147483648
  %v202 = vxor.u32 %v161, 2147483648
  %v203 = vxor.u32 %v163, 2147483648
  %v204 = vmul.f32 %v200, 1.442695
  %v205 = vpow.pop %v204
  %v206 = vmul.f32 %v201, 1.442695
  %v207 = vpow.pop %v206
  %v208 = vmul.f32 %v202, 1.442695
  %v209 = vpow.pop %v208
  %v210 = vmul.f32 %v203, 1.442695
  %v211 = vpow.pop %v210
  %v212 = vadd.f32 %v205, 1.0
  %v213 = vadd.f32 %v207, 1.0
  %v214 = vadd.f32 %v209, 1.0
  %v215 = vadd.f32 %v211, 1.0
  %v216 = vrcp.pop %v212
  %v217 = vmul.f32 %v212, %v216
  %v218 = vsub.f32 1.0, %v217
  %v219 = vmul.f32 %v216, %v218
  %v220 = vadd.f32 %v216, %v219
  %vm221 = vweird.f32 %v212
  %vm222 = vweird.f32 %v216
  %vm223 = vmor %vm221, %vm222
  %v224 = vsel %vm223, %v216, %v220
  %v225 = vand.u32 2147483647, %v212
  %vm226 = vcmp.eq.f32.partialorder %v225, 8.507059e+37
  %v227 = vand.u32 %v212, 2147483648
  %v228 = vor.u32 1.1754944e-38, %v227
  %v229 = vsel %vm226, %v228, %v224
  %v230 = vmul.f32 1.0, %v229
  %v231 = vrcp.pop %v213
  %v232 = vmul.f32 %v213, %v231
  %v233 = vsub.f32 1.0, %v232
  %v234 = vmul.f32 %v231, %v233
  %v235 = vadd.f32 %v231, %v234
  %vm236 = vweird.f32 %v213
  %vm237 = vweird.f32 %v231
  %vm238 = vmor %vm236, %vm237
  %v239 = vsel %vm238, %v231, %v235
  %v240 = vand.u32 2147483647, %v213
  %vm241 = vcmp.eq.f32.partialorder %v240, 8.507059e+37
  %v242 = vand.u32 %v213, 2147483648
  %v243 = vor.u32 1.1754944e-38, %v242
  %v244 = vsel %vm241, %v243, %v239
  %v245 = vmul.f32 1.0, %v244
  %v246 = vrcp.pop %v214
  %v247 = vmul.f32 %v214, %v246
  %v248 = vsub.f32 1.0, %v247
  %v249 = vmul.f32 %v246, %v248
  %v250 = vadd.f32 %v246, %v249
  %vm251 = vweird.f32 %v214
  %vm252 = vweird.f32 %v246
  %vm253 = vmor %vm251, %vm252
  %v254 = vsel %vm253, %v246, %v250
  %v255 = vand.u32 2147483647, %v214
  %vm256 = vcmp.eq.f32.partialorder %v255, 8.507059e+37
  %v257 = vand.u32 %v214, 2147483648
  %v258 = vor.u32 1.1754944e-38, %v257
  %v259 = vsel %vm256, %v258, %v254
  %v260 = vmul.f32 1.0, %v259
  %v261 = vrcp.pop %v215
  %v262 = vmul.f32 %v215, %v261
  %v263 = vsub.f32 1.0, %v262
  %v264 = vmul.f32 %v261, %v263
  %v265 = vadd.f32 %v261, %v264
  %vm266 = vweird.f32 %v215
  %vm267 = vweird.f32 %v261
  %vm268 = vmor %vm266, %vm267
  %v269 = vsel %vm268, %v261, %v265
  %v270 = vand.u32 2147483647, %v215
  %vm271 = vcmp.eq.f32.partialorder %v270, 8.507059e+37
  %v272 = vand.u32 %v215, 2147483648
  %v273 = vor.u32 1.1754944e-38, %v272
  %v274 = vsel %vm271, %v273, %v269
  %v275 = vmul.f32 1.0, %v274
  %v276 = vmul.f32 %v156, %v230
  %v277 = vmul.f32 %v158, %v245
  %v278 = vmul.f32 %v161, %v260
  %v279 = vmul.f32 %v163, %v275
  %v280 = vmul.f32 %v276, %v191
  %v281 = vmul.f32 %v277, %v193
  %v282 = vmul.f32 %v278, %v196
  %v283 = vmul.f32 %v279, %v198
  %v284 = vld [vmem:[#allocation2] sm:$0xff]
  %v285 = vld [vmem:[#allocation2 + $0x8] sm:$0xff]
  %v286 = vld [vmem:[#allocation2 + $0x10] sm:$0xff]
  %v287 = vld [vmem:[#allocation2 + $0x18] sm:$0xff]
  %v288 = vpack.c.bf16 %v281, %v280
  %v289 = vpack.c.bf16 %v283, %v282
  %v290 = vld [vmem:[%s4] sm:$0xf]
  %v291 = vld [vmem:[%s4 + $0x4] sm:$0xf]
  %v292 = vld [vmem:[%s4 + $0x8] sm:$0xf]
  %v293 = vld [vmem:[%s4 + $0xc] sm:$0xf]
  %v294 = vld [vmem:[%s4 + $0x10] sm:$0xf]
  %v295 = vld [vmem:[%s4 + $0x14] sm:$0xf]
  %v296 = vld [vmem:[%s4 + $0x18] sm:$0xf]
  %v297 = vld [vmem:[%s4 + $0x1c] sm:$0xf]
  %v306 = vunpack.c.l.b16 %v290
  %v307 = vunpack.c.l.b16 %v291
  %v308 = vunpack.c.l.b16 %v292
  %v309 = vunpack.c.l.b16 %v293
  %v310 = vunpack.c.l.b16 %v294
  %v311 = vunpack.c.l.b16 %v295
  %v312 = vunpack.c.l.b16 %v296
  %v313 = vunpack.c.l.b16 %v297
  %v314 = vpack.c.b16 %v307, %v306
  %v315 = vpack.c.b16 %v309, %v308
  %v316 = vpack.c.b16 %v311, %v310
  %v317 = vpack.c.b16 %v313, %v312
  %vm322 = vcmask 523264
  %v324 = vsel %vm322, %v288, 0
  %v327 = vsel %vm322, %v289, 0
  %329 = vmatpush.bf16.msra.mxu0 0
  %330 = vmatpush.bf16.msra.mxu0 0
  %331 = vmatpush.bf16.msra.mxu0 0
  %332 = vmatpush.bf16.msra.mxu0 0
  %333 = vmatpush.bf16.msra.mxu0 %v317
  %334 = vmatpush.bf16.msra.mxu0 %v316
  %335 = vmatpush.bf16.msra.mxu0 %v315
  %336 = vmatpush.bf16.msra.mxu0 %v314
  %337 = vmatmul.bf16.gmra.mxu0 %v324
  %v338 = vpop.f32.mrf.mxu0
  %v339 = vadd.f32 0.0, %v338
  %v340 = vpop.f32.mrf.mxu0
  %v341 = vadd.f32 0.0, %v340
  %342 = vmatmul.bf16.gmra.mxu0 %v327
  %v343 = vpop.f32.mrf.mxu0
  %v344 = vadd.f32 0.0, %v343
  %v345 = vpop.f32.mrf.mxu0
  %v346 = vadd.f32 0.0, %v345
  %347 = vdwg.mxu0
  %v348 = vadd.f32 %v284, %v339
  %v349 = vadd.f32 %v285, %v341
  %v350 = vadd.f32 %v286, %v344
  %v351 = vadd.f32 %v287, %v346
  %352 = vst.msk [vmem:[#allocation2] sm:$0xff] %vm42, %v348
  %353 = vst.msk [vmem:[#allocation2 + $0x8] sm:$0xff] %vm42, %v349
  %354 = vst.msk [vmem:[#allocation2 + $0x10] sm:$0xff] %vm42, %v350
  %355 = vst.msk [vmem:[#allocation2 + $0x18] sm:$0xff] %vm42, %v351
  // Predicated region
  $region26: #{mixer_model_forward.15} parent=0 // pred_check
    %p356 = pneg %p21
  $region27: #{mixer_model_forward.15} parent=0 // pred_check_branch
    %358 = sbr.rel (%p356) target = $region29
  $region28: #{mixer_model_forward.15} parent=0 // pred_region
    %v359 = vld [vmem:[#allocation2] sm:$0xff]
    %v360 = vld [vmem:[#allocation2 + $0x8] sm:$0xff]
    %v361 = vld [vmem:[#allocation2 + $0x10] sm:$0xff]
    %v362 = vld [vmem:[#allocation2 + $0x18] sm:$0xff]
    %v363 = vpack.c.bf16 %v359, %v359
    %v364 = vpack.c.bf16 %v360, %v360
    %v365 = vpack.c.bf16 %v361, %v361
    %v366 = vpack.c.bf16 %v362, %v362
    %vm367 = vcmask 257024
    %368 = vst.msk [vmem:[%s5] sm:$0xf] %vm367, %v363
    %369 = vst.msk [vmem:[%s5 + $0x4] sm:$0xf] %vm367, %v364
    %370 = vst.msk [vmem:[%s5 + $0x8] sm:$0xf] %vm367, %v365
    %371 = vst.msk [vmem:[%s5 + $0xc] sm:$0xf] %vm367, %v366
  $region29: #{mixer_model_forward.15} parent=0 // pred_fallthru
    _
  // Predicated region
  $region30: #{mixer_model_forward.15} parent=0 // pred_check
    _
  $region31: #{mixer_model_forward.15} parent=0 // pred_check_branch
    %373 = sbr.rel (0) target = $region33
  $region32: #{mixer_model_forward.15} parent=0 // pred_region
    _
  $region33: #{mixer_model_forward.15} parent=0 // pred_fallthru
    _
  // Predicated region
  $region34: #{mixer_model_forward.15} parent=0 // pred_check
    _
  $region35: #{mixer_model_forward.15} parent=0 // pred_check_branch
    %375 = sbr.rel (0) target = $region37
  $region36: #{mixer_model_forward.15} parent=0 // pred_region
    _
  $region37: #{mixer_model_forward.15} parent=0 // pred_fallthru
    _

</llo_original>
